<compile_context>
chip_gen: v6e
topology: v6e:2x2x1
jax: 0.10.0
libtpu: 0.0.40
codegen_flags: <defaults>
</compile_context>

<pallas_src>
import functools

import jax
import jax.numpy as jnp
import numpy as np
from jax.experimental import pallas as pl
from jax.experimental.pallas import tpu as pltpu

LANE = 128  # lane width; all matmul feature dims padded to multiples of this


def _round_up(v, m):
    return ((v + m - 1) // m) * m


def _pad2(a, rows, cols):
    return jnp.pad(a, ((0, rows - a.shape[0]), (0, cols - a.shape[1])))


# ----------------------------------------------------------------------------
# Fused RGCN layer kernel.
#
# Grid: (row_tiles, relations, k_tiles) with semantics (parallel, arbitrary,
# arbitrary).  Per step:
#   ax_acc  += A[r][row_tile, k_tile] @ x[k_tile]                (f32 accum)
#   at k==last:   out_acc += ax_acc @ W_rel[r]                   (f32 accum)
#   at r==0,k==0: out_acc  = x[row_tile] @ W_root + bias
#   at r==last,k==last: out = [relu](out_acc)
# ----------------------------------------------------------------------------
def _fused_layer_kernel(a_ref, xk_ref, xrow_ref, wroot_ref, b_ref, wrel_ref,
                        out_ref, ax_acc, out_acc, *, apply_relu):
    r = pl.program_id(1)
    k = pl.program_id(2)
    num_r = pl.num_programs(1)
    num_k = pl.num_programs(2)

    # Root term + bias initialize the output accumulator once per row tile.
    @pl.when(jnp.logical_and(r == 0, k == 0))
    def _():
        out_acc[...] = (
            jnp.dot(xrow_ref[...], wroot_ref[...],
                    preferred_element_type=jnp.float32)
            + b_ref[...]
        )

    # Reset the per-relation aggregation accumulator at the start of the K loop.
    @pl.when(k == 0)
    def _():
        ax_acc[...] = jnp.zeros_like(ax_acc)

    # Partial mean-aggregation for this (relation, K tile).
    ax_acc[...] += jnp.dot(a_ref[...], xk_ref[...],
                           preferred_element_type=jnp.float32)

    # End of the K loop for this relation: fold through W_rel[r].
    @pl.when(k == num_k - 1)
    def _():
        out_acc[...] += jnp.dot(ax_acc[...].astype(wrel_ref.dtype),
                                wrel_ref[...],
                                preferred_element_type=jnp.float32)

    # Last relation, last K tile: activation + single lane-dense store.
    @pl.when(jnp.logical_and(r == num_r - 1, k == num_k - 1))
    def _():
        res = out_acc[...]
        if apply_relu:
            res = jnp.maximum(res, 0.0)
        out_ref[...] = res.astype(out_ref.dtype)


def rgcn_layer(x_p, w_root, bias, adj_p, w_rel, *, apply_relu, tm=256, tk=512):
    """One fused RGCN layer on padded inputs.

    x_p:   [N_p, F_in_p]  bf16 (padded; padded rows/cols zero)
    adj_p: [R, N_p, N_p]  bf16 (padded; mean-normalized)
    w_root [F_in, F_out], w_rel [R, F_in, F_out], bias [F_out]  (unpadded f32)
    Returns [N_p, F_out_p] bf16; padded columns are exactly zero.
    """
    n_p, f_in_p_x = x_p.shape
    f_in, f_out = w_root.shape
    f_in_p = _round_up(f_in, LANE)
    f_out_p = _round_up(f_out, LANE)
    assert f_in_p == f_in_p_x, (f_in_p, f_in_p_x)

    num_rel = w_rel.shape[0]
    if num_rel == 0:
        # Guard: one zero dummy relation so the root term + bias are never dropped.
        w_rel = jnp.zeros((1, f_in, f_out), w_root.dtype)
        num_rel = 1
    assert adj_p.shape[0] == num_rel, (adj_p.shape, num_rel)

    tm = min(tm, n_p)
    tk = min(tk, n_p)
    assert n_p % tm == 0 and n_p % tk == 0, (n_p, tm, tk)

    w_root_p = _pad2(w_root, f_in_p, f_out_p).astype(jnp.bfloat16)
    bias_p = jnp.pad(bias, (0, f_out_p - f_out)).reshape(1, f_out_p).astype(jnp.float32)
    w_rel_p = jnp.pad(
        w_rel, ((0, 0), (0, f_in_p - f_in), (0, f_out_p - f_out))
    ).astype(jnp.bfloat16)

    grid_rows = n_p // tm
    k_tiles = n_p // tk

    kernel = functools.partial(_fused_layer_kernel, apply_relu=apply_relu)
    out = pl.pallas_call(
        kernel,
        out_shape=jax.ShapeDtypeStruct((n_p, f_out_p), jnp.bfloat16),
        grid_spec=pltpu.PrefetchScalarGridSpec(
            num_scalar_prefetch=0,
            grid=(grid_rows, num_rel, k_tiles),
            in_specs=[
                # A[r] tile: rows of this row-tile, K-tile of columns.
                pl.BlockSpec((pl.Squeezed(), tm, tk), lambda i, r, k: (r, i, k)),
                # x as K-tile (contraction operand of the aggregation matmul).
                pl.BlockSpec((tk, f_in_p), lambda i, r, k: (k, 0)),
                # x as row tile (root-term operand; constant across r, k).
                pl.BlockSpec((tm, f_in_p), lambda i, r, k: (i, 0)),
                pl.BlockSpec((f_in_p, f_out_p), lambda i, r, k: (0, 0)),    # W_root
                pl.BlockSpec((1, f_out_p), lambda i, r, k: (0, 0)),         # bias
                pl.BlockSpec((pl.Squeezed(), f_in_p, f_out_p),
                             lambda i, r, k: (r, 0, 0)),                    # W_rel[r]
            ],
            out_specs=pl.BlockSpec((tm, f_out_p), lambda i, r, k: (i, 0)),
            scratch_shapes=[
                pltpu.VMEM((tm, f_in_p), jnp.float32),    # ax_acc
                pltpu.VMEM((tm, f_out_p), jnp.float32),   # out_acc
            ],
        ),
        compiler_params=pltpu.CompilerParams(
            dimension_semantics=("parallel", "arbitrary", "arbitrary"),
            vmem_limit_bytes=48 * 1024 * 1024,  # v7x-safe (<64 MiB per TC)
        ),
    )(adj_p, x_p, x_p, w_root_p, bias_p, w_rel_p)
    return out


# ----------------------------------------------------------------------------
# Decoder: Linear -> ReLU -> Dropout(eval: identity) -> Linear
# Tiled over pairs ("parallel"); all dims lane-dense (padded to 128).
# ----------------------------------------------------------------------------
def _decoder_kernel(e_ref, w1_ref, b1_ref, w2_ref, b2_ref, out_ref):
    h = jnp.dot(e_ref[...], w1_ref[...], preferred_element_type=jnp.float32)
    h = jnp.maximum(h + b1_ref[...], 0.0)
    # TODO(synk): Dropout(0.3) is identity here (eval semantics); PyTorch
    # training-mode RNG cannot be reproduced bit-exactly.
    out_ref[...] = (
        jnp.dot(h.astype(w2_ref.dtype), w2_ref[...], preferred_element_type=jnp.float32)
        + b2_ref[...]
    ).astype(out_ref.dtype)


def decoder(edge_feats_p, w1, b1, w2, b2, *, f_out, tp=256):
    """edge_feats_p: [P_p, 2*F_out_p] bf16 with halves at [0:F_out_p], [F_out_p:2*F_out_p]."""
    p_p, two_f_out_p = edge_feats_p.shape
    f_out_p = two_f_out_p // 2
    f_dec = w1.shape[1]
    n_cls = w2.shape[1]
    f_dec_p = _round_up(f_dec, LANE)
    n_cls_p = _round_up(n_cls, LANE)
    tp = min(tp, p_p)
    assert p_p % tp == 0

    # Match W1 rows to the padded-concat layout of edge_feats.
    w1_top = _pad2(w1[:f_out], f_out_p, f_dec_p)
    w1_bot = _pad2(w1[f_out:], f_out_p, f_dec_p)
    w1_p = jnp.concatenate([w1_top, w1_bot], axis=0).astype(jnp.bfloat16)
    b1_p = jnp.pad(b1, (0, f_dec_p - f_dec)).reshape(1, f_dec_p).astype(jnp.float32)
    w2_p = _pad2(w2, f_dec_p, n_cls_p).astype(jnp.bfloat16)
    b2_p = jnp.pad(b2, (0, n_cls_p - n_cls)).reshape(1, n_cls_p).astype(jnp.float32)

    out = pl.pallas_call(
        _decoder_kernel,
        out_shape=jax.ShapeDtypeStruct((p_p, n_cls_p), jnp.float32),
        grid_spec=pltpu.PrefetchScalarGridSpec(
            num_scalar_prefetch=0,
            grid=(p_p // tp,),
            in_specs=[
                pl.BlockSpec((tp, two_f_out_p), lambda i: (i, 0)),
                pl.BlockSpec((two_f_out_p, f_dec_p), lambda i: (0, 0)),
                pl.BlockSpec((1, f_dec_p), lambda i: (0, 0)),
                pl.BlockSpec((f_dec_p, n_cls_p), lambda i: (0, 0)),
                pl.BlockSpec((1, n_cls_p), lambda i: (0, 0)),
            ],
            out_specs=pl.BlockSpec((tp, n_cls_p), lambda i: (i, 0)),
        ),
        compiler_params=pltpu.CompilerParams(
            dimension_semantics=("parallel",),
            vmem_limit_bytes=32 * 1024 * 1024,
        ),
    )(edge_feats_p, w1_p, b1_p, w2_p, b2_p)
    return out[:, :n_cls]


# ----------------------------------------------------------------------------
# Glue: dense per-relation mean-normalized adjacency, built directly into the
# padded layout and cast to bf16 once (no second padded copy).
# ----------------------------------------------------------------------------
def build_relation_adjacency_padded(edge_index, edge_type, num_nodes,
                                    num_relations, n_p):
    # TODO(synk): for large/sparse graphs replace the dense A[R,N,N] with a CSR
    # layout + scalar-prefetched DMA gathers; dense is fine at these sizes.
    r_eff = max(num_relations, 1)
    src = edge_index[0]
    dst = edge_index[1]
    adj = jnp.zeros((r_eff, n_p, n_p), jnp.float32)
    if num_relations > 0:
        adj = adj.at[edge_type, dst, src].add(1.0)
    deg = adj.sum(axis=-1, keepdims=True)          # per (relation, dst) in-degree
    adj = adj / jnp.maximum(deg, 1.0)              # 'mean' aggregation
    return adj.astype(jnp.bfloat16)


def rgcn_model_forward(params, x, edge_index, edge_type, pairs=None, *,
                       tm=256, tk=512):
    num_nodes, in_feats = x.shape
    num_relations = params["conv1"]["w_rel"].shape[0]
    out_feats = params["conv2"]["w_root"].shape[1]

    # Pad node count so both the row tile (tm) and the contraction tile (tk)
    # divide it (tm, tk are powers of two -> lcm == max).
    n_p = _round_up(num_nodes, max(tm, tk))
    f_in_p = _round_up(in_feats, LANE)

    adj_p = build_relation_adjacency_padded(edge_index, edge_type, num_nodes,
                                            num_relations, n_p)
    x_p = _pad2(x, n_p, f_in_p).astype(jnp.bfloat16)

    h = rgcn_layer(x_p, params["conv1"]["w_root"], params["conv1"]["bias"],
                   adj_p, params["conv1"]["w_rel"], apply_relu=True, tm=tm, tk=tk)
    h = rgcn_layer(h, params["conv2"]["w_root"], params["conv2"]["bias"],
                   adj_p, params["conv2"]["w_rel"], apply_relu=False, tm=tm, tk=tk)

    if pairs is None:
        return h[:num_nodes, :out_feats].astype(jnp.float32)

    # TODO(synk): for large P, fuse this gather into the decoder kernel via
    # scalar-prefetched `pairs` + manual make_async_copy row gathers on h;
    # the XLA gather + concat is fine at these sizes.
    num_pairs = pairs.shape[0]
    tp = 256
    p_p = _round_up(num_pairs, min(tp, _round_up(num_pairs, LANE)))
    p_p = _round_up(p_p, LANE)
    pairs_p = jnp.pad(pairs, ((0, p_p - num_pairs), (0, 0)))
    src, dst = pairs_p[:, 0], pairs_p[:, 1]
    edge_feats = jnp.concatenate([h[src], h[dst]], axis=1)   # [P_p, 2*F_out_p] bf16

    logits = decoder(edge_feats,
                     params["dec"]["w1"], params["dec"]["b1"],
                     params["dec"]["w2"], params["dec"]["b2"],
                     f_out=out_feats, tp=min(tp, p_p))
    return logits[:num_pairs]


# ----------------------------------------------------------------------------
# Pure-JAX f32 reference (same math, no Pallas / no padding / no bf16).
# ----------------------------------------------------------------------------
def _build_relation_adjacency_f32(edge_index, edge_type, num_nodes, num_relations):
    src, dst = edge_index[0], edge_index[1]
    adj = jnp.zeros((max(num_relations, 1), num_nodes, num_nodes), jnp.float32)
    if num_relations > 0:
        adj = adj.at[edge_type, dst, src].add(1.0)
    deg = adj.sum(axis=-1, keepdims=True)
    return adj / jnp.maximum(deg, 1.0)


def reference_forward(params, x, edge_index, edge_type, pairs):
    num_nodes = x.shape[0]
    num_relations = params["conv1"]["w_rel"].shape[0]
    adj = _build_relation_adjacency_f32(edge_index, edge_type, num_nodes, num_relations)

    def layer(h, p):
        out = h @ p["w_root"] + p["bias"]
        out = out + jnp.einsum("rnm,rmf->nf", adj,
                               jnp.einsum("mi,rif->rmf", h, p["w_rel"]))
        return out

    h = jax.nn.relu(layer(x, params["conv1"]))
    h = layer(h, params["conv2"])
    src, dst = pairs[:, 0], pairs[:, 1]
    e = jnp.concatenate([h[src], h[dst]], axis=1)
    e = jax.nn.relu(e @ params["dec"]["w1"] + params["dec"]["b1"])
    return e @ params["dec"]["w2"] + params["dec"]["b2"]


def init_params(key, in_feats, hidden_feats, out_feats, num_relations, num_classes):
    ks = jax.random.split(key, 10)
    s = 0.1
    return {
        "conv1": {
            "w_root": s * jax.random.normal(ks[0], (in_feats, hidden_feats), jnp.float32),
            "w_rel": s * jax.random.normal(ks[1], (num_relations, in_feats, hidden_feats), jnp.float32),
            "bias": s * jax.random.normal(ks[2], (hidden_feats,), jnp.float32),
        },
        "conv2": {
            "w_root": s * jax.random.normal(ks[3], (hidden_feats, out_feats), jnp.float32),
            "w_rel": s * jax.random.normal(ks[4], (num_relations, hidden_feats, out_feats), jnp.float32),
            "bias": s * jax.random.normal(ks[5], (out_feats,), jnp.float32),
        },
        "dec": {
            "w1": s * jax.random.normal(ks[6], (2 * out_feats, out_feats), jnp.float32),
            "b1": s * jax.random.normal(ks[7], (out_feats,), jnp.float32),
            "w2": s * jax.random.normal(ks[8], (out_feats, num_classes), jnp.float32),
            "b2": s * jax.random.normal(ks[9], (num_classes,), jnp.float32),
        },
    }


if __name__ == "__main__":
    in_feats, hidden_feats, out_feats = 8, 32, 16
    num_relations, num_classes = 3, 4
    num_nodes, num_edges, num_pairs = 16, 48, 8

    key = jax.random.PRNGKey(0)
    k_param, k_x, k_src, k_dst, k_typ, k_pair = jax.random.split(key, 6)

    params = init_params(k_param, in_feats, hidden_feats, out_feats,
                         num_relations, num_classes)

    x = jax.random.normal(k_x, (num_nodes, in_feats), jnp.float32)
    edge_index = jnp.stack([
        jax.random.randint(k_src, (num_edges,), 0, num_nodes),
        jax.random.randint(k_dst, (num_edges,), 0, num_nodes),
    ], axis=0)
    edge_type = jax.random.randint(k_typ, (num_edges,), 0, num_relations)
    pairs = jax.random.randint(k_pair, (num_pairs, 2), 0, num_nodes)

    out = rgcn_model_forward(params, x, edge_index, edge_type, pairs)
    out = jax.block_until_ready(out)

    ref = reference_forward(params, x, edge_index, edge_type, pairs)
    # bf16 MXU inputs with f32 accumulation -> loosened tolerance vs f32 reference.
    np.testing.assert_allclose(np.asarray(out), np.asarray(ref),
                               rtol=2e-2, atol=2e-2)
    print("KERNEL_OK")
</pallas_src>

<mosaic_0001>
module attributes {stable_mosaic.version = 11 : i64} {
  func.func @_fused_layer_kernel(%arg0: i32, %arg1: i32, %arg2: i32, %arg3: memref<1x256x512xbf16, #tpu.memory_space<vmem>>, %arg4: memref<512x128xbf16, #tpu.memory_space<vmem>>, %arg5: memref<256x128xbf16, #tpu.memory_space<vmem>>, %arg6: memref<128x128xbf16, #tpu.memory_space<vmem>>, %arg7: memref<1x128xf32, #tpu.memory_space<vmem>>, %arg8: memref<1x128x128xbf16, #tpu.memory_space<vmem>>, %arg9: memref<256x128xbf16, #tpu.memory_space<vmem>>, %arg10: memref<256x128xf32, #tpu.memory_space<vmem>>, %arg11: memref<256x128xf32, #tpu.memory_space<vmem>>) attributes {dimension_semantics = [#tpu.dimension_semantics<parallel>, #tpu.dimension_semantics<arbitrary>, #tpu.dimension_semantics<arbitrary>], iteration_bounds = array<i64: 2, 3, 1>, scalar_prefetch = 0 : i64, scratch_operands = 2 : i64, tpu.core_type = #tpu.core_type<tc>, window_params = [{transform_indices = @transform_0, window_bounds = array<i64: 1, 256, 512>}, {transform_indices = @transform_1, window_bounds = array<i64: 512, 128>}, {transform_indices = @transform_2, window_bounds = array<i64: 256, 128>}, {pipeline_mode = #tpu.pipeline_mode<synchronous>, transform_indices = @transform_3, window_bounds = array<i64: 128, 128>}, {pipeline_mode = #tpu.pipeline_mode<synchronous>, transform_indices = @transform_4, window_bounds = array<i64: 1, 128>}, {transform_indices = @transform_5, window_bounds = array<i64: 1, 128, 128>}, {transform_indices = @transform_6, window_bounds = array<i64: 256, 128>}]} {
    %c0_i32 = arith.constant 0 : i32
    %0 = arith.cmpi eq, %arg1, %c0_i32 : i32
    %c0_i32_0 = arith.constant 0 : i32
    %1 = arith.cmpi eq, %arg2, %c0_i32_0 : i32
    %2 = arith.andi %0, %1 : i1
    %3 = arith.extui %2 : i1 to i32
    %c0_i32_1 = arith.constant 0 : i32
    %4 = arith.cmpi ne, %3, %c0_i32_1 : i32
    scf.if %4 {
      %c0_16 = arith.constant 0 : index
      %c0_17 = arith.constant 0 : index
      %23 = vector.load %arg5[%c0_16, %c0_17] : memref<256x128xbf16, #tpu.memory_space<vmem>>, vector<256x128xbf16>
      %c0_18 = arith.constant 0 : index
      %c0_19 = arith.constant 0 : index
      %24 = vector.load %arg6[%c0_18, %c0_19] : memref<128x128xbf16, #tpu.memory_space<vmem>>, vector<128x128xbf16>
      %cst_20 = arith.constant dense<0.000000e+00> : vector<256x128xf32>
      %25 = tpu.matmul %23, %24, %cst_20 {dimension_numbers = #tpu.dot_dimension_numbers<[1], [0], [0], [1], [0, 0, 1, 1], [], []>} : vector<256x128xbf16>, vector<128x128xbf16>, vector<256x128xf32> -> vector<256x128xf32>
      %c0_21 = arith.constant 0 : index
      %c0_22 = arith.constant 0 : index
      %26 = vector.load %arg7[%c0_21, %c0_22] : memref<1x128xf32, #tpu.memory_space<vmem>>, vector<1x128xf32>
      %27 = vector.broadcast %26 : vector<1x128xf32> to vector<256x128xf32>
      %28 = arith.addf %25, %27 : vector<256x128xf32>
      %c0_23 = arith.constant 0 : index
      %c0_24 = arith.constant 0 : index
      %29 = vector.load %arg11[%c0_23, %c0_24] : memref<256x128xf32, #tpu.memory_space<vmem>>, vector<256x128xf32>
      tpu.vector_store %arg11[%c0_23, %c0_24], %28 {strides = array<i32>} : memref<256x128xf32, #tpu.memory_space<vmem>>, vector<256x128xf32>,
    } else {
    }
    %c0_i32_2 = arith.constant 0 : i32
    %5 = arith.cmpi eq, %arg2, %c0_i32_2 : i32
    %6 = arith.extui %5 : i1 to i32
    %c0_i32_3 = arith.constant 0 : i32
    %7 = arith.cmpi ne, %6, %c0_i32_3 : i32
    scf.if %7 {
      %cst_16 = arith.constant 0.000000e+00 : f32
      %23 = vector.broadcast %cst_16 : f32 to vector<256x128xf32>
      %c0_17 = arith.constant 0 : index
      %c0_18 = arith.constant 0 : index
      %24 = vector.load %arg10[%c0_17, %c0_18] : memref<256x128xf32, #tpu.memory_space<vmem>>, vector<256x128xf32>
      tpu.vector_store %arg10[%c0_17, %c0_18], %23 {strides = array<i32>} : memref<256x128xf32, #tpu.memory_space<vmem>>, vector<256x128xf32>,
    } else {
    }
    %c0 = arith.constant 0 : index
    %c0_4 = arith.constant 0 : index
    %8 = vector.load %arg10[%c0, %c0_4] : memref<256x128xf32, #tpu.memory_space<vmem>>, vector<256x128xf32>
    %c0_5 = arith.constant 0 : index
    %c0_6 = arith.constant 0 : index
    %c0_7 = arith.constant 0 : index
    %9 = vector.load %arg3[%c0_5, %c0_6, %c0_7] : memref<1x256x512xbf16, #tpu.memory_space<vmem>>, vector<1x256x512xbf16>
    %10 = vector.shape_cast %9 : vector<1x256x512xbf16> to vector<256x512xbf16>
    %c0_8 = arith.constant 0 : index
    %c0_9 = arith.constant 0 : index
    %11 = vector.load %arg4[%c0_8, %c0_9] : memref<512x128xbf16, #tpu.memory_space<vmem>>, vector<512x128xbf16>
    %cst = arith.constant dense<0.000000e+00> : vector<256x128xf32>
    %12 = tpu.matmul %10, %11, %cst {dimension_numbers = #tpu.dot_dimension_numbers<[1], [0], [0], [1], [0, 0, 1, 1], [], []>} : vector<256x512xbf16>, vector<512x128xbf16>, vector<256x128xf32> -> vector<256x128xf32>
    %13 = arith.addf %8, %12 : vector<256x128xf32>
    %c0_10 = arith.constant 0 : index
    %c0_11 = arith.constant 0 : index
    %14 = vector.load %arg10[%c0_10, %c0_11] : memref<256x128xf32, #tpu.memory_space<vmem>>, vector<256x128xf32>
    tpu.vector_store %arg10[%c0_10, %c0_11], %13 {strides = array<i32>} : memref<256x128xf32, #tpu.memory_space<vmem>>, vector<256x128xf32>,
    %c0_i32_12 = arith.constant 0 : i32
    %15 = arith.cmpi eq, %arg2, %c0_i32_12 : i32
    %16 = arith.extui %15 : i1 to i32
    %c0_i32_13 = arith.constant 0 : i32
    %17 = arith.cmpi ne, %16, %c0_i32_13 : i32
    scf.if %17 {
      %c0_16 = arith.constant 0 : index
      %c0_17 = arith.constant 0 : index
      %23 = vector.load %arg11[%c0_16, %c0_17] : memref<256x128xf32, #tpu.memory_space<vmem>>, vector<256x128xf32>
      %c0_18 = arith.constant 0 : index
      %c0_19 = arith.constant 0 : index
      %24 = vector.load %arg10[%c0_18, %c0_19] : memref<256x128xf32, #tpu.memory_space<vmem>>, vector<256x128xf32>
      %25 = arith.truncf %24 : vector<256x128xf32> to vector<256x128xbf16>
      %c0_20 = arith.constant 0 : index
      %c0_21 = arith.constant 0 : index
      %c0_22 = arith.constant 0 : index
      %26 = vector.load %arg8[%c0_20, %c0_21, %c0_22] : memref<1x128x128xbf16, #tpu.memory_space<vmem>>, vector<1x128x128xbf16>
      %27 = vector.shape_cast %26 : vector<1x128x128xbf16> to vector<128x128xbf16>
      %cst_23 = arith.constant dense<0.000000e+00> : vector<256x128xf32>
      %28 = tpu.matmul %25, %27, %cst_23 {dimension_numbers = #tpu.dot_dimension_numbers<[1], [0], [0], [1], [0, 0, 1, 1], [], []>} : vector<256x128xbf16>, vector<128x128xbf16>, vector<256x128xf32> -> vector<256x128xf32>
      %29 = arith.addf %23, %28 : vector<256x128xf32>
      %c0_24 = arith.constant 0 : index
      %c0_25 = arith.constant 0 : index
      %30 = vector.load %arg11[%c0_24, %c0_25] : memref<256x128xf32, #tpu.memory_space<vmem>>, vector<256x128xf32>
      tpu.vector_store %arg11[%c0_24, %c0_25], %29 {strides = array<i32>} : memref<256x128xf32, #tpu.memory_space<vmem>>, vector<256x128xf32>,
    } else {
    }
    %c2_i32 = arith.constant 2 : i32
    %18 = arith.cmpi eq, %arg1, %c2_i32 : i32
    %c0_i32_14 = arith.constant 0 : i32
    %19 = arith.cmpi eq, %arg2, %c0_i32_14 : i32
    %20 = arith.andi %18, %19 : i1
    %21 = arith.extui %20 : i1 to i32
    %c0_i32_15 = arith.constant 0 : i32
    %22 = arith.cmpi ne, %21, %c0_i32_15 : i32
    scf.if %22 {
      %c0_16 = arith.constant 0 : index
      %c0_17 = arith.constant 0 : index
      %23 = vector.load %arg11[%c0_16, %c0_17] : memref<256x128xf32, #tpu.memory_space<vmem>>, vector<256x128xf32>
      %cst_18 = arith.constant 0.000000e+00 : f32
      %24 = vector.broadcast %cst_18 : f32 to vector<256x128xf32>
      %25 = arith.maximumf %23, %24 : vector<256x128xf32>
      %26 = arith.truncf %25 : vector<256x128xf32> to vector<256x128xbf16>
      %c0_19 = arith.constant 0 : index
      %c0_20 = arith.constant 0 : index
      %27 = vector.load %arg9[%c0_19, %c0_20] : memref<256x128xbf16, #tpu.memory_space<vmem>>, vector<256x128xbf16>
      tpu.vector_store %arg9[%c0_19, %c0_20], %26 {strides = array<i32>} : memref<256x128xbf16, #tpu.memory_space<vmem>>, vector<256x128xbf16>,
    } else {
    }
    return
  }
  func.func @transform_0(%arg0: i32, %arg1: i32, %arg2: i32) -> (i32, i32, i32) {
    %c0_i32 = arith.constant 0 : i32
    return %arg1, %arg0, %arg2 : i32, i32, i32
  }
  func.func @transform_1(%arg0: i32, %arg1: i32, %arg2: i32) -> (i32, i32) {
    %c0_i32 = arith.constant 0 : i32
    %c0_i32_0 = arith.constant 0 : i32
    return %arg2, %c0_i32 : i32, i32
  }
  func.func @transform_2(%arg0: i32, %arg1: i32, %arg2: i32) -> (i32, i32) {
    %c0_i32 = arith.constant 0 : i32
    %c0_i32_0 = arith.constant 0 : i32
    return %arg0, %c0_i32 : i32, i32
  }
  func.func @transform_3(%arg0: i32, %arg1: i32, %arg2: i32) -> (i32, i32) {
    %c0_i32 = arith.constant 0 : i32
    %c0_i32_0 = arith.constant 0 : i32
    %c0_i32_1 = arith.constant 0 : i32
    return %c0_i32, %c0_i32_0 : i32, i32
  }
  func.func @transform_4(%arg0: i32, %arg1: i32, %arg2: i32) -> (i32, i32) {
    %c0_i32 = arith.constant 0 : i32
    %c0_i32_0 = arith.constant 0 : i32
    %c0_i32_1 = arith.constant 0 : i32
    return %c0_i32, %c0_i32_0 : i32, i32
  }
  func.func @transform_5(%arg0: i32, %arg1: i32, %arg2: i32) -> (i32, i32, i32) {
    %c0_i32 = arith.constant 0 : i32
    %c0_i32_0 = arith.constant 0 : i32
    %c0_i32_1 = arith.constant 0 : i32
    return %arg1, %c0_i32, %c0_i32_0 : i32, i32, i32
  }
  func.func @transform_6(%arg0: i32, %arg1: i32, %arg2: i32) -> (i32, i32) {
    %c0_i32 = arith.constant 0 : i32
    %c0_i32_0 = arith.constant 0 : i32
    return %arg0, %c0_i32 : i32, i32
  }
}

</mosaic_0001>

<llo_original>
// kernel: tpu_custom_call.1
$region0: #{tpu_custom_call.1}
  #allocation0 [shape = 'u32[]', space=smem, size = 0x4, offset = 0x4, fixed_abs, tag = 'smem constant byte address 0x4 - core index']
  #allocation1 [shape = 'u32[144,128]{1,0:T(1,128)}', space=vmem, size = 0x12000, scoped, tag = 'internal scratch']
  #allocation2 [shape = 'f32[256,128]{1,0:T(8,128)}', space=vmem, size = 0x20000, scoped, tag = 'scratch operand']
  #allocation3 [shape = 'f32[256,128]{1,0:T(8,128)}', space=vmem, size = 0x20000, scoped, tag = 'scratch operand']
  %s0 = inlined_call_operand.hbm [shape: bf16[3,512,512], index: 0, kind: input, shape index: {}]
  %s1 = inlined_call_operand.hbm [shape: bf16[512,128], index: 1, kind: input, shape index: {}]
  %s2 = inlined_call_operand.hbm [shape: bf16[512,128], index: 2, kind: input, shape index: {}]
  %s3 = inlined_call_operand.hbm [shape: bf16[128,128], index: 3, kind: input, shape index: {}]
  %s4 = inlined_call_operand.hbm [shape: f32[1,128], index: 4, kind: input, shape index: {}]
  %s5 = inlined_call_operand.hbm [shape: bf16[3,128,128], index: 5, kind: input, shape index: {}]
  %s6 = inlined_call_operand.hbm [shape: bf16[512,128], index: 6, kind: output, shape index: {}]
  %s7 = sld [smem:[#allocation0]]
  $region97: #{tpu_custom_call.1} parent=0
    _
  %s9 = ssub.s32 1, %s7
  %s10 = scalar_select 0, %s9, %s7
  $region1: #{tpu_custom_call.1} parent=0
    #allocation4 [shape = 'u8[524288]{0}', space=vmem, size = 0x80000, scoped, tag = 'input window, operand 0']
    #allocation5 [shape = 's32[2]{0}', space=sflag, size = 0x8, scoped, tag = 'scoped memory for tpu_custom_call.1']
    #allocation6 [shape = 's32[2]{0}', space=sflag, size = 0x8, scoped, tag = 'scoped memory for tpu_custom_call.1']
    #allocation7 [shape = 'u8[131072]{0}', space=vmem, size = 0x20000, scoped, tag = 'input window, operand 1, single buffered']
    #allocation8 [shape = 's32[1]{0}', space=sflag, size = 0x4, scoped, tag = 'scoped memory for tpu_custom_call.1']
    #allocation9 [shape = 'u8[131072]{0}', space=vmem, size = 0x20000, scoped, tag = 'input window, operand 2']
    #allocation10 [shape = 'u8[32768]{0}', space=vmem, size = 0x8000, scoped, tag = 'input window, operand 3, single buffered']
    #allocation11 [shape = 'u8[512]{0}', space=vmem, size = 0x400, scoped, tag = 'input window, operand 4, single buffered']
    #allocation12 [shape = 's32[1]{0}', space=sflag, size = 0x4, scoped, tag = 'scoped memory for tpu_custom_call.1']
    #allocation13 [shape = 'u8[65536]{0}', space=vmem, size = 0x10000, scoped, tag = 'input window, operand 5']
    #allocation14 [shape = 'u8[131072]{0}', space=vmem, size = 0x20000, scoped, tag = 'output window, operand 0']
    %11 = vsyncpa [#allocation5], 0
    %s12 = scalar_lea.sflag [#allocation5], 1
    %13 = vsyncpa %s12, 0
    %14 = vsyncpa [#allocation8], 0
    %15 = vsyncpa [#allocation12], 0
    %16 = vsyncpa [#allocation6], 0
    %s17 = scalar_lea.sflag [#allocation6], 1
    %18 = vsyncpa %s17, 0
    loop: start=0, step=1, limit=8
    $region2: #{tpu_custom_call.1} parent=1 // loop_pre_header
      _
    $region3: #{tpu_custom_call.1} parent=1 // loop_header
      %s20 = sphi 0, %s24
      %p21 = scmp.ge.s32.totalorder %s20, 8
      %s27 = sphi 0, %s46
      %s28 = sphi 0, %s42
      %s29 = sphi 0, %s38
      %s30 = sphi 0, %s27
      %s31 = sphi 0, %s28
      %s32 = sphi 0, %s29
      %s33 = sphi 0, %s30
      %s34 = sphi 0, %s31
      %s35 = sphi 0, %s32
      %s53 = sphi 0, %s55
      %s56 = sphi 0, %s53
      %s57 = sphi 0, %s56
      %s73 = sphi 0, %s57
      %s79 = sphi 0, %s81
      %s82 = sphi 0, %s79
      %s83 = sphi 0, %s82
      %s99 = sphi 0, %s83
      %s105 = sphi 0, %s107
      %s108 = sphi 0, %s105
      %s109 = sphi 0, %s108
      %s125 = sphi 0, %s109
      %s129 = sphi 0, %s129
      %s131 = sphi 0, %s129
      %s132 = sphi 0, %s131
      %s146 = sphi 0, %s132
      %s150 = sphi 0, %s150
      %s152 = sphi 0, %s150
      %s153 = sphi 0, %s152
      %s167 = sphi 0, %s153
      %s173 = sphi 0, %s175
      %s176 = sphi 0, %s173
      %s177 = sphi 0, %s176
      %s193 = sphi 0, %s177
      %s199 = sphi 0, %s201
      %s202 = sphi 0, %s199
      %s203 = sphi 0, %s202
      %s219 = sphi 0, %s203
    $region4: #{tpu_custom_call.1} parent=1 // loop_header_branch
      %23 = sbr.rel (%p21) target = $region8
    $region5: #{tpu_custom_call.1} parent=1 // loop_body
      %s25 = ssub.s32 %s20, 1
      %s26 = ssub.s32 %s20, 2
      %s36 = sadd.s32 1, %s29
      %p37 = scmp.ge.s32.totalorder %s36, 1
      %s38 = scalar_select %p37, 0, %s36
      %s39 = sadd.s32 1, %s28
      %s40 = scalar_select %p37, %s39, %s28
      %p41 = scmp.ge.s32.totalorder %s40, 3
      %s42 = scalar_select %p41, 0, %s40
      %s43 = sadd.s32 1, %s27
      %s44 = scalar_select %p41, %s43, %s27
      %p45 = scmp.ge.s32.totalorder %s44, 2
      %s46 = scalar_select %p45, 0, %s44
      %s47 = ssub.s32 %s28, %s42
      %s48 = ssub.s32 %s27, %s46
      %s49 = sor.u32 %s47, %s48
      %s50 = ssub.s32 %s29, %s38
      %s51 = sor.u32 %s49, %s50
      %p52 = scmp.eq.s32.totalorder %s51, 0
      %s54 = sadd.s32 %s53, 1
      %s55 = scalar_select %p52, %s53, %s54
      %p58 = pneg %p52
      %p59 = scmp.eq.s32.totalorder %s20, 5
      %p60 = por %p58, %p59
      %p61 = scmp.ne.s32.totalorder %s53, %s56
      %p62 = scmp.eq.s32.totalorder %s20, 0
      %p63 = por %p61, %p62
      %p64 = scmp.ne.s32.totalorder %s53, %s56
      %p65 = scmp.eq.s32.totalorder %s25, 5
      %p66 = por %p64, %p65
      %p67 = scmp.ne.s32.totalorder %s56, %s57
      %p68 = scmp.eq.s32.totalorder %s25, 0
      %p69 = por %p67, %p68
      %p70 = scmp.ne.s32.totalorder %s56, %s57
      %p71 = scmp.eq.s32.totalorder %s26, 5
      %p72 = por %p70, %p71
      %p74 = scmp.ne.s32.totalorder %s57, %s73
      %p75 = scmp.eq.s32.totalorder %s26, 0
      %p76 = por %p74, %p75
      %s77 = ssub.s32 %s29, %s38
      %p78 = scmp.eq.s32.totalorder %s77, 0
      %s80 = sadd.s32 %s79, 1
      %s81 = scalar_select %p78, %s79, %s80
      %p84 = pneg %p78
      %p85 = scmp.eq.s32.totalorder %s20, 5
      %p86 = por %p84, %p85
      %p87 = scmp.ne.s32.totalorder %s79, %s82
      %p88 = scmp.eq.s32.totalorder %s20, 0
      %p89 = por %p87, %p88
      %p90 = scmp.ne.s32.totalorder %s79, %s82
      %p91 = scmp.eq.s32.totalorder %s25, 5
      %p92 = por %p90, %p91
      %p93 = scmp.ne.s32.totalorder %s82, %s83
      %p94 = scmp.eq.s32.totalorder %s25, 0
      %p95 = por %p93, %p94
      %p96 = scmp.ne.s32.totalorder %s82, %s83
      %p97 = scmp.eq.s32.totalorder %s26, 5
      %p98 = por %p96, %p97
      %p100 = scmp.ne.s32.totalorder %s83, %s99
      %p101 = scmp.eq.s32.totalorder %s26, 0
      %p102 = por %p100, %p101
      %s103 = ssub.s32 %s27, %s46
      %p104 = scmp.eq.s32.totalorder %s103, 0
      %s106 = sadd.s32 %s105, 1
      %s107 = scalar_select %p104, %s105, %s106
      %p110 = pneg %p104
      %p111 = scmp.eq.s32.totalorder %s20, 5
      %p112 = por %p110, %p111
      %p113 = scmp.ne.s32.totalorder %s105, %s108
      %p114 = scmp.eq.s32.totalorder %s20, 0
      %p115 = por %p113, %p114
      %p116 = scmp.ne.s32.totalorder %s105, %s108
      %p117 = scmp.eq.s32.totalorder %s25, 5
      %p118 = por %p116, %p117
      %p119 = scmp.ne.s32.totalorder %s108, %s109
      %p120 = scmp.eq.s32.totalorder %s25, 0
      %p121 = por %p119, %p120
      %p122 = scmp.ne.s32.totalorder %s108, %s109
      %p123 = scmp.eq.s32.totalorder %s26, 5
      %p124 = por %p122, %p123
      %p126 = scmp.ne.s32.totalorder %s109, %s125
      %p127 = scmp.eq.s32.totalorder %s26, 0
      %p128 = por %p126, %p127
      %s130 = sadd.s32 %s129, 1
      %p133 = scmp.eq.s32.totalorder %s20, 5
      %p134 = scmp.ne.s32.totalorder %s129, %s131
      %p135 = scmp.eq.s32.totalorder %s20, 0
      %p136 = por %p134, %p135
      %p137 = scmp.ne.s32.totalorder %s129, %s131
      %p138 = scmp.eq.s32.totalorder %s25, 5
      %p139 = por %p137, %p138
      %p140 = scmp.ne.s32.totalorder %s131, %s132
      %p141 = scmp.eq.s32.totalorder %s25, 0
      %p142 = por %p140, %p141
      %p143 = scmp.ne.s32.totalorder %s131, %s132
      %p144 = scmp.eq.s32.totalorder %s26, 5
      %p145 = por %p143, %p144
      %p147 = scmp.ne.s32.totalorder %s132, %s146
      %p148 = scmp.eq.s32.totalorder %s26, 0
      %p149 = por %p147, %p148
      %s151 = sadd.s32 %s150, 1
      %p154 = scmp.eq.s32.totalorder %s20, 5
      %p155 = scmp.ne.s32.totalorder %s150, %s152
      %p156 = scmp.eq.s32.totalorder %s20, 0
      %p157 = por %p155, %p156
      %p158 = scmp.ne.s32.totalorder %s150, %s152
      %p159 = scmp.eq.s32.totalorder %s25, 5
      %p160 = por %p158, %p159
      %p161 = scmp.ne.s32.totalorder %s152, %s153
      %p162 = scmp.eq.s32.totalorder %s25, 0
      %p163 = por %p161, %p162
      %p164 = scmp.ne.s32.totalorder %s152, %s153
      %p165 = scmp.eq.s32.totalorder %s26, 5
      %p166 = por %p164, %p165
      %p168 = scmp.ne.s32.totalorder %s153, %s167
      %p169 = scmp.eq.s32.totalorder %s26, 0
      %p170 = por %p168, %p169
      %s171 = ssub.s32 %s28, %s42
      %p172 = scmp.eq.s32.totalorder %s171, 0
      %s174 = sadd.s32 %s173, 1
      %s175 = scalar_select %p172, %s173, %s174
      %p178 = pneg %p172
      %p179 = scmp.eq.s32.totalorder %s20, 5
      %p180 = por %p178, %p179
      %p181 = scmp.ne.s32.totalorder %s173, %s176
      %p182 = scmp.eq.s32.totalorder %s20, 0
      %p183 = por %p181, %p182
      %p184 = scmp.ne.s32.totalorder %s173, %s176
      %p185 = scmp.eq.s32.totalorder %s25, 5
      %p186 = por %p184, %p185
      %p187 = scmp.ne.s32.totalorder %s176, %s177
      %p188 = scmp.eq.s32.totalorder %s25, 0
      %p189 = por %p187, %p188
      %p190 = scmp.ne.s32.totalorder %s176, %s177
      %p191 = scmp.eq.s32.totalorder %s26, 5
      %p192 = por %p190, %p191
      %p194 = scmp.ne.s32.totalorder %s177, %s193
      %p195 = scmp.eq.s32.totalorder %s26, 0
      %p196 = por %p194, %p195
      %s197 = ssub.s32 %s27, %s46
      %p198 = scmp.eq.s32.totalorder %s197, 0
      %s200 = sadd.s32 %s199, 1
      %s201 = scalar_select %p198, %s199, %s200
      %p204 = pneg %p198
      %p205 = scmp.eq.s32.totalorder %s20, 5
      %p206 = por %p204, %p205
      %p207 = scmp.ne.s32.totalorder %s199, %s202
      %p208 = scmp.eq.s32.totalorder %s20, 0
      %p209 = por %p207, %p208
      %p210 = scmp.ne.s32.totalorder %s199, %s202
      %p211 = scmp.eq.s32.totalorder %s25, 5
      %p212 = por %p210, %p211
      %p213 = scmp.ne.s32.totalorder %s202, %s203
      %p214 = scmp.eq.s32.totalorder %s25, 0
      %p215 = por %p213, %p214
      %p216 = scmp.ne.s32.totalorder %s202, %s203
      %p217 = scmp.eq.s32.totalorder %s26, 5
      %p218 = por %p216, %p217
      %p220 = scmp.ne.s32.totalorder %s203, %s219
      %p221 = scmp.eq.s32.totalorder %s26, 0
      %p222 = por %p220, %p221
      %p223 = scmp.le.s32.totalorder 1, %s20
      %p224 = scmp.lt.s32.totalorder %s20, 7
      %p225 = pnand %p223, %p224
      %p226 = pneg %p225
      // Predicated region
      $region9: #{tpu_custom_call.1} parent=5 // pred_check
        _
      $region10: #{tpu_custom_call.1} parent=5 // pred_check_branch
        %228 = sbr.rel (%p225) target = $region12
      $region11: #{tpu_custom_call.1} parent=5 // pred_region
        %s229 = ssub.s32 %s20, 1
        // Predicated region
        $region13: #{tpu_custom_call.1} parent=11 // pred_check
          %p230 = pneg %p95
        $region14: #{tpu_custom_call.1} parent=11 // pred_check_branch
          %232 = sbr.rel (%p230) target = $region16
        $region15: #{tpu_custom_call.1} parent=11 // pred_region
          %s233 = smul.u32 64, %s32
          %s235 = ssub.s32 4096, 4096
          %236 = vsyncadd [#allocation8], %s235
          %s237 = smul.addr %s233, 64
          %s238 = scalar_lea.hbm %s1, %s237
          %s239 = sshll.u32 [#allocation7], 4
          %s240 = int_to_ptr.vmem [resolvable:$true] %s239
          %245 = dma.hbm_to_vmem [thread:$0]  %s238, 4096, %s240, [#allocation8], 64, 64, 4
        $region16: #{tpu_custom_call.1} parent=11 // pred_fallthru
          _
        // Predicated region
        $region17: #{tpu_custom_call.1} parent=11 // pred_check
          %p246 = pneg %p142
        $region18: #{tpu_custom_call.1} parent=11 // pred_check_branch
          %248 = sbr.rel (%p246) target = $region20
        $region19: #{tpu_custom_call.1} parent=11 // pred_region
          %s250 = ssub.s32 1024, 1024
          %251 = vsyncadd [#allocation8], %s250
          %s252 = sshll.u32 [#allocation10], 4
          %s253 = int_to_ptr.vmem [resolvable:$true] %s252
          %258 = dma.hbm_to_vmem [thread:$0]  %s3, 1024, %s253, [#allocation8], 64, 64, 4
        $region20: #{tpu_custom_call.1} parent=11 // pred_fallthru
          _
        // Predicated region
        $region21: #{tpu_custom_call.1} parent=11 // pred_check
          %p259 = pneg %p163
        $region22: #{tpu_custom_call.1} parent=11 // pred_check_branch
          %261 = sbr.rel (%p259) target = $region24
        $region23: #{tpu_custom_call.1} parent=11 // pred_region
          %s263 = ssub.s32 16, 16
          %264 = vsyncadd [#allocation12], %s263
          %s266 = sshll.u32 [#allocation11], 4
          %s267 = int_to_ptr.vmem [resolvable:$true] %s266
          %269 = dma.hbm_to_vmem [thread:$0]  %s4, 16, %s267, [#allocation12]
        $region24: #{tpu_custom_call.1} parent=11 // pred_fallthru
          _
      $region12: #{tpu_custom_call.1} parent=5 // pred_fallthru
        _
      %p270 = scmp.lt.s32.totalorder %s20, 6
      // Predicated region
      $region25: #{tpu_custom_call.1} parent=5 // pred_check
        %p271 = pneg %p270
      $region26: #{tpu_custom_call.1} parent=5 // pred_check_branch
        %273 = sbr.rel (%p271) target = $region28
      $region27: #{tpu_custom_call.1} parent=5 // pred_region
        // Predicated region
        $region29: #{tpu_custom_call.1} parent=27 // pred_check
          %p274 = pneg %p63
        $region30: #{tpu_custom_call.1} parent=27 // pred_check_branch
          %276 = sbr.rel (%p274) target = $region32
        $region31: #{tpu_custom_call.1} parent=27 // pred_region
          %s277 = sand.u32 %s20, 1
          %s278 = scalar_lea.sflag [#allocation5], %s277
          %s279 = sand.u32 %s53, 1
          %s280 = smul.addr %s279, 512
          %s281 = scalar_lea.vmem [#allocation4], %s280
          %s282 = smul.u32 32, %s27
          %s283 = smul.u32 4, %s29
          %s285 = ssub.s32 8192, 8192
          %286 = vsyncadd %s278, %s285
          %s287 = smul.addr %s282, 4
          %s288 = sadd.s32 %s283, %s287
          %s289 = smul.addr %s28, 256
          %s290 = sadd.s32 %s288, %s289
          %s291 = smul.addr %s290, 64
          %s292 = scalar_lea.hbm %s0, %s291
          %s293 = sshll.u32 %s281, 4
          %s294 = int_to_ptr.vmem [resolvable:$true] %s293
          %299 = dma.hbm_to_vmem [thread:$0]  %s292, 8192, %s294, %s278, 256, 256, 16
        $region32: #{tpu_custom_call.1} parent=27 // pred_fallthru
          _
        // Predicated region
        $region33: #{tpu_custom_call.1} parent=27 // pred_check
          %p300 = pneg %p115
        $region34: #{tpu_custom_call.1} parent=27 // pred_check_branch
          %302 = sbr.rel (%p300) target = $region36
        $region35: #{tpu_custom_call.1} parent=27 // pred_region
          %s303 = sand.u32 %s20, 1
          %s304 = scalar_lea.sflag [#allocation5], %s303
          %s305 = sand.u32 %s105, 1
          %s306 = smul.addr %s305, 128
          %s307 = scalar_lea.vmem [#allocation9], %s306
          %s308 = smul.u32 32, %s27
          %s310 = ssub.s32 2048, 2048
          %311 = vsyncadd %s304, %s310
          %s312 = smul.addr %s308, 64
          %s313 = scalar_lea.hbm %s2, %s312
          %s314 = sshll.u32 %s307, 4
          %s315 = int_to_ptr.vmem [resolvable:$true] %s314
          %320 = dma.hbm_to_vmem [thread:$0]  %s313, 2048, %s315, %s304, 64, 64, 4
        $region36: #{tpu_custom_call.1} parent=27 // pred_fallthru
          _
        // Predicated region
        $region37: #{tpu_custom_call.1} parent=27 // pred_check
          %p321 = pneg %p183
        $region38: #{tpu_custom_call.1} parent=27 // pred_check_branch
          %323 = sbr.rel (%p321) target = $region40
        $region39: #{tpu_custom_call.1} parent=27 // pred_region
          %s324 = sand.u32 %s20, 1
          %s325 = scalar_lea.sflag [#allocation5], %s324
          %s326 = sand.u32 %s173, 1
          %s327 = smul.addr %s326, 64
          %s328 = scalar_lea.vmem [#allocation13], %s327
          %s330 = ssub.s32 1024, 1024
          %331 = vsyncadd %s325, %s330
          %s332 = smul.addr %s28, 16
          %s333 = smul.addr %s332, 64
          %s334 = scalar_lea.hbm %s5, %s333
          %s335 = sshll.u32 %s328, 4
          %s336 = int_to_ptr.vmem [resolvable:$true] %s335
          %341 = dma.hbm_to_vmem [thread:$0]  %s334, 1024, %s336, %s325, 64, 64, 4
        $region40: #{tpu_custom_call.1} parent=27 // pred_fallthru
          _
      $region28: #{tpu_custom_call.1} parent=5 // pred_fallthru
        _
      %p342 = scmp.le.s32.totalorder 1, %s20
      %p343 = scmp.lt.s32.totalorder %s20, 7
      %p344 = pnand %p342, %p343
      %p345 = pneg %p344
      // Predicated region
      $region41: #{tpu_custom_call.1} parent=5 // pred_check
        _
      $region42: #{tpu_custom_call.1} parent=5 // pred_check_branch
        %347 = sbr.rel (%p344) target = $region44
      $region43: #{tpu_custom_call.1} parent=5 // pred_region
        %s348 = ssub.s32 %s20, 1
        %s349 = sand.u32 %s25, 1
        %s350 = scalar_lea.sflag [#allocation5], %s349
        %s351 = sand.u32 %s56, 1
        %s352 = smul.addr %s351, 512
        %s353 = scalar_lea.vmem [#allocation4], %s352
        // Predicated region
        $region45: #{tpu_custom_call.1} parent=43 // pred_check
          %p354 = pneg %p69
        $region46: #{tpu_custom_call.1} parent=43 // pred_check_branch
          %356 = sbr.rel (%p354) target = $region48
        $region47: #{tpu_custom_call.1} parent=43 // pred_region
          %357 = dma.done %s350, 8192
        $region48: #{tpu_custom_call.1} parent=43 // pred_fallthru
          _
        // Predicated region
        $region49: #{tpu_custom_call.1} parent=43 // pred_check
          %p358 = pneg %p95
        $region50: #{tpu_custom_call.1} parent=43 // pred_check_branch
          %360 = sbr.rel (%p358) target = $region52
        $region51: #{tpu_custom_call.1} parent=43 // pred_region
          %361 = dma.done [#allocation8], 4096
        $region52: #{tpu_custom_call.1} parent=43 // pred_fallthru
          _
        %s362 = sand.u32 %s25, 1
        %s363 = scalar_lea.sflag [#allocation5], %s362
        %s364 = sand.u32 %s108, 1
        %s365 = smul.addr %s364, 128
        %s366 = scalar_lea.vmem [#allocation9], %s365
        // Predicated region
        $region53: #{tpu_custom_call.1} parent=43 // pred_check
          %p367 = pneg %p121
        $region54: #{tpu_custom_call.1} parent=43 // pred_check_branch
          %369 = sbr.rel (%p367) target = $region56
        $region55: #{tpu_custom_call.1} parent=43 // pred_region
          %370 = dma.done %s363, 2048
        $region56: #{tpu_custom_call.1} parent=43 // pred_fallthru
          _
        // Predicated region
        $region57: #{tpu_custom_call.1} parent=43 // pred_check
          %p371 = pneg %p142
        $region58: #{tpu_custom_call.1} parent=43 // pred_check_branch
          %373 = sbr.rel (%p371) target = $region60
        $region59: #{tpu_custom_call.1} parent=43 // pred_region
          %374 = dma.done [#allocation8], 1024
        $region60: #{tpu_custom_call.1} parent=43 // pred_fallthru
          _
        // Predicated region
        $region61: #{tpu_custom_call.1} parent=43 // pred_check
          %p375 = pneg %p163
        $region62: #{tpu_custom_call.1} parent=43 // pred_check_branch
          %377 = sbr.rel (%p375) target = $region64
        $region63: #{tpu_custom_call.1} parent=43 // pred_region
          %378 = dma.done [#allocation12], 16
        $region64: #{tpu_custom_call.1} parent=43 // pred_fallthru
          _
        %s379 = sand.u32 %s25, 1
        %s380 = scalar_lea.sflag [#allocation5], %s379
        %s381 = sand.u32 %s176, 1
        %s382 = smul.addr %s381, 64
        %s383 = scalar_lea.vmem [#allocation13], %s382
        // Predicated region
        $region65: #{tpu_custom_call.1} parent=43 // pred_check
          %p384 = pneg %p189
        $region66: #{tpu_custom_call.1} parent=43 // pred_check_branch
          %386 = sbr.rel (%p384) target = $region68
        $region67: #{tpu_custom_call.1} parent=43 // pred_region
          %387 = dma.done %s380, 1024
        $region68: #{tpu_custom_call.1} parent=43 // pred_fallthru
          _
        %s388 = sand.u32 %s25, 1
        %s389 = scalar_lea.sflag [#allocation5], %s388
        %s390 = sand.u32 %s56, 1
        %s391 = smul.addr %s390, 512
        %s392 = scalar_lea.vmem [#allocation4], %s391
        %p393 = pneg %p69
        %p394 = pneg %p66
        %p395 = pneg %p95
        %p396 = pneg %p92
        %s397 = sand.u32 %s25, 1
        %s398 = scalar_lea.sflag [#allocation5], %s397
        %s399 = sand.u32 %s108, 1
        %s400 = smul.addr %s399, 128
        %s401 = scalar_lea.vmem [#allocation9], %s400
        %p402 = pneg %p121
        %p403 = pneg %p118
        %p404 = pneg %p142
        %p405 = pneg %p139
        %p406 = pneg %p163
        %p407 = pneg %p160
        %s408 = sand.u32 %s25, 1
        %s409 = scalar_lea.sflag [#allocation5], %s408
        %s410 = sand.u32 %s176, 1
        %s411 = smul.addr %s410, 64
        %s412 = scalar_lea.vmem [#allocation13], %s411
        %p413 = pneg %p189
        %p414 = pneg %p186
        %p415 = pneg %p215
        %p416 = pneg %p212
        %s417 = sand.u32 %s202, 1
        %s418 = scalar_lea.sflag [#allocation6], %s417
        %s419 = sand.u32 %s202, 1
        %s420 = smul.addr %s419, 128
        %s421 = scalar_lea.vmem [#allocation14], %s420
        %s422 = smul.u32 32, %s30
        %s423 = smul.u32 4, %s32
        %s424 = smul.u32 64, %s32
        %s425 = smul.u32 32, %s30
        %s426 = smul.u32 32, %s30
        %p428 = scmp.eq.s32.totalorder %s31, 0
        %p429 = scmp.eq.s32.totalorder %s32, 0
        %p430 = pnand %p428, %p429
        %p431 = pneg %p430
        // Predicated region
        $region69: #{tpu_custom_call.1} parent=43 // pred_check
          _
        $region70: #{tpu_custom_call.1} parent=43 // pred_check_branch
          %433 = sbr.rel (%p430) target = $region72
        $region71: #{tpu_custom_call.1} parent=43 // pred_region
          %v434 = vld [vmem:[%s366] sm:$0xf]
          %v435 = vld [vmem:[%s366 + $0x4] sm:$0xf]
          %v436 = vld [vmem:[%s366 + $0x8] sm:$0xf]
          %v437 = vld [vmem:[%s366 + $0xc] sm:$0xf]
          %v438 = vld [vmem:[%s366 + $0x10] sm:$0xf]
          %v439 = vld [vmem:[%s366 + $0x14] sm:$0xf]
          %v440 = vld [vmem:[%s366 + $0x18] sm:$0xf]
          %v441 = vld [vmem:[%s366 + $0x1c] sm:$0xf]
          %v442 = vld [vmem:[%s366 + $0x20] sm:$0xf]
          %v443 = vld [vmem:[%s366 + $0x24] sm:$0xf]
          %v444 = vld [vmem:[%s366 + $0x28] sm:$0xf]
          %v445 = vld [vmem:[%s366 + $0x2c] sm:$0xf]
          %v446 = vld [vmem:[%s366 + $0x30] sm:$0xf]
          %v447 = vld [vmem:[%s366 + $0x34] sm:$0xf]
          %v448 = vld [vmem:[%s366 + $0x38] sm:$0xf]
          %v449 = vld [vmem:[%s366 + $0x3c] sm:$0xf]
          %v450 = vld [vmem:[%s366 + $0x40] sm:$0xf]
          %v451 = vld [vmem:[%s366 + $0x44] sm:$0xf]
          %v452 = vld [vmem:[%s366 + $0x48] sm:$0xf]
          %v453 = vld [vmem:[%s366 + $0x4c] sm:$0xf]
          %v454 = vld [vmem:[%s366 + $0x50] sm:$0xf]
          %v455 = vld [vmem:[%s366 + $0x54] sm:$0xf]
          %v456 = vld [vmem:[%s366 + $0x58] sm:$0xf]
          %v457 = vld [vmem:[%s366 + $0x5c] sm:$0xf]
          %v458 = vld [vmem:[%s366 + $0x60] sm:$0xf]
          %v459 = vld [vmem:[%s366 + $0x64] sm:$0xf]
          %v460 = vld [vmem:[%s366 + $0x68] sm:$0xf]
          %v461 = vld [vmem:[%s366 + $0x6c] sm:$0xf]
          %v462 = vld [vmem:[%s366 + $0x70] sm:$0xf]
          %v463 = vld [vmem:[%s366 + $0x74] sm:$0xf]
          %v464 = vld [vmem:[%s366 + $0x78] sm:$0xf]
          %v465 = vld [vmem:[%s366 + $0x7c] sm:$0xf]
          %v466 = vld [vmem:[#allocation10] sm:$0xf]
          %v467 = vld [vmem:[#allocation10 + $0x4] sm:$0xf]
          %v468 = vld [vmem:[#allocation10 + $0x8] sm:$0xf]
          %v469 = vld [vmem:[#allocation10 + $0xc] sm:$0xf]
          %v470 = vld [vmem:[#allocation10 + $0x10] sm:$0xf]
          %v471 = vld [vmem:[#allocation10 + $0x14] sm:$0xf]
          %v472 = vld [vmem:[#allocation10 + $0x18] sm:$0xf]
          %v473 = vld [vmem:[#allocation10 + $0x1c] sm:$0xf]
          %v474 = vld [vmem:[#allocation10 + $0x20] sm:$0xf]
          %v475 = vld [vmem:[#allocation10 + $0x24] sm:$0xf]
          %v476 = vld [vmem:[#allocation10 + $0x28] sm:$0xf]
          %v477 = vld [vmem:[#allocation10 + $0x2c] sm:$0xf]
          %v478 = vld [vmem:[#allocation10 + $0x30] sm:$0xf]
          %v479 = vld [vmem:[#allocation10 + $0x34] sm:$0xf]
          %v480 = vld [vmem:[#allocation10 + $0x38] sm:$0xf]
          %v481 = vld [vmem:[#allocation10 + $0x3c] sm:$0xf]
          %v482 = vld [vmem:[#allocation11] sm:$0x1]
          %v484 = vlaneseq
          %v485 = vshrl.u32 %v484, 7
          %v486 = vsub.s32 0, %v485
          %v487 = vrot.slane %v482, %v486
          %v521 = vunpack.c.l.b16 %v434
          %v522 = vunpack.c.l.b16 %v435
          %v523 = vunpack.c.l.b16 %v436
          %v524 = vunpack.c.l.b16 %v437
          %v525 = vunpack.c.l.b16 %v438
          %v526 = vunpack.c.l.b16 %v439
          %v527 = vunpack.c.l.b16 %v440
          %v528 = vunpack.c.l.b16 %v441
          %v529 = vunpack.c.l.b16 %v442
          %v530 = vunpack.c.l.b16 %v443
          %v531 = vunpack.c.l.b16 %v444
          %v532 = vunpack.c.l.b16 %v445
          %v533 = vunpack.c.l.b16 %v446
          %v534 = vunpack.c.l.b16 %v447
          %v535 = vunpack.c.l.b16 %v448
          %v536 = vunpack.c.l.b16 %v449
          %v537 = vunpack.c.l.b16 %v450
          %v538 = vunpack.c.l.b16 %v451
          %v539 = vunpack.c.l.b16 %v452
          %v540 = vunpack.c.l.b16 %v453
          %v541 = vunpack.c.l.b16 %v454
          %v542 = vunpack.c.l.b16 %v455
          %v543 = vunpack.c.l.b16 %v456
          %v544 = vunpack.c.l.b16 %v457
          %v545 = vunpack.c.l.b16 %v458
          %v546 = vunpack.c.l.b16 %v459
          %v547 = vunpack.c.l.b16 %v460
          %v548 = vunpack.c.l.b16 %v461
          %v549 = vunpack.c.l.b16 %v462
          %v550 = vunpack.c.l.b16 %v463
          %v551 = vunpack.c.l.b16 %v464
          %v552 = vunpack.c.l.b16 %v465
          %v553 = vpack.c.b16 %v522, %v521
          %v554 = vpack.c.b16 %v524, %v523
          %v555 = vpack.c.b16 %v526, %v525
          %v556 = vpack.c.b16 %v528, %v527
          %v557 = vpack.c.b16 %v530, %v529
          %v558 = vpack.c.b16 %v532, %v531
          %v559 = vpack.c.b16 %v534, %v533
          %v560 = vpack.c.b16 %v536, %v535
          %v561 = vpack.c.b16 %v538, %v537
          %v562 = vpack.c.b16 %v540, %v539
          %v563 = vpack.c.b16 %v542, %v541
          %v564 = vpack.c.b16 %v544, %v543
          %v565 = vpack.c.b16 %v546, %v545
          %v566 = vpack.c.b16 %v548, %v547
          %v567 = vpack.c.b16 %v550, %v549
          %v568 = vpack.c.b16 %v552, %v551
          %v601 = vunpack.c.l.b16 %v466
          %v602 = vunpack.c.l.b16 %v467
          %v603 = vunpack.c.l.b16 %v468
          %v604 = vunpack.c.l.b16 %v469
          %v605 = vunpack.c.l.b16 %v470
          %v606 = vunpack.c.l.b16 %v471
          %v607 = vunpack.c.l.b16 %v472
          %v608 = vunpack.c.l.b16 %v473
          %v609 = vunpack.c.l.b16 %v474
          %v610 = vunpack.c.l.b16 %v475
          %v611 = vunpack.c.l.b16 %v476
          %v612 = vunpack.c.l.b16 %v477
          %v613 = vunpack.c.l.b16 %v478
          %v614 = vunpack.c.l.b16 %v479
          %v615 = vunpack.c.l.b16 %v480
          %v616 = vunpack.c.l.b16 %v481
          %v617 = vpack.c.b16 %v602, %v601
          %v618 = vpack.c.b16 %v604, %v603
          %v619 = vpack.c.b16 %v606, %v605
          %v620 = vpack.c.b16 %v608, %v607
          %v621 = vpack.c.b16 %v610, %v609
          %v622 = vpack.c.b16 %v612, %v611
          %v623 = vpack.c.b16 %v614, %v613
          %v624 = vpack.c.b16 %v616, %v615
          %633 = vmatprep.subr.bf16.mxu0 0
          %634 = vmatpush1.bf16.msra.mxu0 %v624
          %635 = vmatprep.subr.bf16.mxu0 0
          %636 = vmatpush1.bf16.msra.mxu0 %v623
          %637 = vmatprep.subr.bf16.mxu0 0
          %638 = vmatpush1.bf16.msra.mxu0 %v622
          %639 = vmatprep.subr.bf16.mxu0 0
          %640 = vmatpush1.bf16.msra.mxu0 %v621
          %641 = vmatprep.subr.bf16.mxu0 0
          %642 = vmatpush1.bf16.msra.mxu0 %v620
          %643 = vmatprep.subr.bf16.mxu0 0
          %644 = vmatpush1.bf16.msra.mxu0 %v619
          %645 = vmatprep.subr.bf16.mxu0 0
          %646 = vmatpush1.bf16.msra.mxu0 %v618
          %647 = vmatprep.subr.bf16.mxu0 0
          %648 = vmatpush1.bf16.msra.mxu0 %v617
          %649 = vmatprep.subr.bf16.mxu0 0
          %650 = vmatpush2.bf16.msra.mxu0 0
          %651 = vmatprep.subr.bf16.mxu0 0
          %652 = vmatpush2.bf16.msra.mxu0 0
          %653 = vmatprep.subr.bf16.mxu0 0
          %654 = vmatpush2.bf16.msra.mxu0 0
          %655 = vmatprep.subr.bf16.mxu0 0
          %656 = vmatpush2.bf16.msra.mxu0 0
          %657 = vmatprep.subr.bf16.mxu0 0
          %658 = vmatpush2.bf16.msra.mxu0 0
          %659 = vmatprep.subr.bf16.mxu0 0
          %660 = vmatpush2.bf16.msra.mxu0 0
          %661 = vmatprep.subr.bf16.mxu0 0
          %662 = vmatpush2.bf16.msra.mxu0 0
          %663 = vmatprep.subr.bf16.mxu0 0
          %664 = vmatpush2.bf16.msra.mxu0 0
          %665 = vmatprep.mubr.bf16.mxu0 0
          %666 = vmatmul.mubr.bf16.gmra.mxu0 %v553
          %v667 = vpop.f32.mrf.mxu0
          %v668 = vadd.f32 %v487, %v667
          %v669 = vpop.f32.mrf.mxu0
          %v670 = vpop.f32.mrf.mxu0
          %v671 = vadd.f32 %v487, %v670
          %v672 = vpop.f32.mrf.mxu0
          %673 = vmatprep.mubr.bf16.mxu0 0
          %674 = vmatmul.mubr.bf16.gmra.mxu0 %v554
          %v675 = vpop.f32.mrf.mxu0
          %v676 = vadd.f32 %v487, %v675
          %v677 = vpop.f32.mrf.mxu0
          %v678 = vpop.f32.mrf.mxu0
          %v679 = vadd.f32 %v487, %v678
          %v680 = vpop.f32.mrf.mxu0
          %681 = vmatprep.mubr.bf16.mxu0 0
          %682 = vmatmul.mubr.bf16.gmra.mxu0 %v555
          %v683 = vpop.f32.mrf.mxu0
          %v684 = vadd.f32 %v487, %v683
          %v685 = vpop.f32.mrf.mxu0
          %v686 = vpop.f32.mrf.mxu0
          %v687 = vadd.f32 %v487, %v686
          %v688 = vpop.f32.mrf.mxu0
          %689 = vmatprep.mubr.bf16.mxu0 0
          %690 = vmatmul.mubr.bf16.gmra.mxu0 %v556
          %v691 = vpop.f32.mrf.mxu0
          %v692 = vadd.f32 %v487, %v691
          %v693 = vpop.f32.mrf.mxu0
          %v694 = vpop.f32.mrf.mxu0
          %v695 = vadd.f32 %v487, %v694
          %v696 = vpop.f32.mrf.mxu0
          %697 = vmatprep.mubr.bf16.mxu0 0
          %698 = vmatmul.mubr.bf16.gmra.mxu0 %v557
          %v699 = vpop.f32.mrf.mxu0
          %v700 = vadd.f32 %v487, %v699
          %v701 = vpop.f32.mrf.mxu0
          %v702 = vpop.f32.mrf.mxu0
          %v703 = vadd.f32 %v487, %v702
          %v704 = vpop.f32.mrf.mxu0
          %705 = vmatprep.mubr.bf16.mxu0 0
          %706 = vmatmul.mubr.bf16.gmra.mxu0 %v558
          %v707 = vpop.f32.mrf.mxu0
          %v708 = vadd.f32 %v487, %v707
          %v709 = vpop.f32.mrf.mxu0
          %v710 = vpop.f32.mrf.mxu0
          %v711 = vadd.f32 %v487, %v710
          %v712 = vpop.f32.mrf.mxu0
          %713 = vmatprep.mubr.bf16.mxu0 0
          %714 = vmatmul.mubr.bf16.gmra.mxu0 %v559
          %v715 = vpop.f32.mrf.mxu0
          %v716 = vadd.f32 %v487, %v715
          %v717 = vpop.f32.mrf.mxu0
          %v718 = vpop.f32.mrf.mxu0
          %v719 = vadd.f32 %v487, %v718
          %v720 = vpop.f32.mrf.mxu0
          %721 = vmatprep.mubr.bf16.mxu0 0
          %722 = vmatmul.mubr.bf16.gmra.mxu0 %v560
          %v723 = vpop.f32.mrf.mxu0
          %v724 = vadd.f32 %v487, %v723
          %v725 = vpop.f32.mrf.mxu0
          %v726 = vpop.f32.mrf.mxu0
          %v727 = vadd.f32 %v487, %v726
          %v728 = vpop.f32.mrf.mxu0
          %729 = vmatprep.mubr.bf16.mxu0 0
          %730 = vmatmul.mubr.bf16.gmra.mxu0 %v561
          %v731 = vpop.f32.mrf.mxu0
          %v732 = vadd.f32 %v487, %v731
          %v733 = vpop.f32.mrf.mxu0
          %v734 = vpop.f32.mrf.mxu0
          %v735 = vadd.f32 %v487, %v734
          %v736 = vpop.f32.mrf.mxu0
          %737 = vmatprep.mubr.bf16.mxu0 0
          %738 = vmatmul.mubr.bf16.gmra.mxu0 %v562
          %v739 = vpop.f32.mrf.mxu0
          %v740 = vadd.f32 %v487, %v739
          %v741 = vpop.f32.mrf.mxu0
          %v742 = vpop.f32.mrf.mxu0
          %v743 = vadd.f32 %v487, %v742
          %v744 = vpop.f32.mrf.mxu0
          %745 = vmatprep.mubr.bf16.mxu0 0
          %746 = vmatmul.mubr.bf16.gmra.mxu0 %v563
          %v747 = vpop.f32.mrf.mxu0
          %v748 = vadd.f32 %v487, %v747
          %v749 = vpop.f32.mrf.mxu0
          %v750 = vpop.f32.mrf.mxu0
          %v751 = vadd.f32 %v487, %v750
          %v752 = vpop.f32.mrf.mxu0
          %753 = vmatprep.mubr.bf16.mxu0 0
          %754 = vmatmul.mubr.bf16.gmra.mxu0 %v564
          %v755 = vpop.f32.mrf.mxu0
          %v756 = vadd.f32 %v487, %v755
          %v757 = vpop.f32.mrf.mxu0
          %v758 = vpop.f32.mrf.mxu0
          %v759 = vadd.f32 %v487, %v758
          %v760 = vpop.f32.mrf.mxu0
          %761 = vmatprep.mubr.bf16.mxu0 0
          %762 = vmatmul.mubr.bf16.gmra.mxu0 %v565
          %v763 = vpop.f32.mrf.mxu0
          %v764 = vadd.f32 %v487, %v763
          %v765 = vpop.f32.mrf.mxu0
          %v766 = vpop.f32.mrf.mxu0
          %v767 = vadd.f32 %v487, %v766
          %v768 = vpop.f32.mrf.mxu0
          %769 = vmatprep.mubr.bf16.mxu0 0
          %770 = vmatmul.mubr.bf16.gmra.mxu0 %v566
          %v771 = vpop.f32.mrf.mxu0
          %v772 = vadd.f32 %v487, %v771
          %v773 = vpop.f32.mrf.mxu0
          %v774 = vpop.f32.mrf.mxu0
          %v775 = vadd.f32 %v487, %v774
          %v776 = vpop.f32.mrf.mxu0
          %777 = vmatprep.mubr.bf16.mxu0 0
          %778 = vmatmul.mubr.bf16.gmra.mxu0 %v567
          %v779 = vpop.f32.mrf.mxu0
          %v780 = vadd.f32 %v487, %v779
          %v781 = vpop.f32.mrf.mxu0
          %v782 = vpop.f32.mrf.mxu0
          %v783 = vadd.f32 %v487, %v782
          %v784 = vpop.f32.mrf.mxu0
          %785 = vmatprep.mubr.bf16.mxu0 0
          %786 = vmatmul.mubr.bf16.gmra.mxu0 %v568
          %v787 = vpop.f32.mrf.mxu0
          %v788 = vadd.f32 %v487, %v787
          %v789 = vpop.f32.mrf.mxu0
          %v790 = vpop.f32.mrf.mxu0
          %v791 = vadd.f32 %v487, %v790
          %v792 = vpop.f32.mrf.mxu0
          %793 = vdwg.mxu0
          %794 = vst [vmem:[#allocation3] sm:$0xff] %v668
          %795 = vst [vmem:[#allocation3 + $0x8] sm:$0xff] %v671
          %796 = vst [vmem:[#allocation3 + $0x10] sm:$0xff] %v676
          %797 = vst [vmem:[#allocation3 + $0x18] sm:$0xff] %v679
          %798 = vst [vmem:[#allocation3 + $0x20] sm:$0xff] %v684
          %799 = vst [vmem:[#allocation3 + $0x28] sm:$0xff] %v687
          %800 = vst [vmem:[#allocation3 + $0x30] sm:$0xff] %v692
          %801 = vst [vmem:[#allocation3 + $0x38] sm:$0xff] %v695
          %802 = vst [vmem:[#allocation3 + $0x40] sm:$0xff] %v700
          %803 = vst [vmem:[#allocation3 + $0x48] sm:$0xff] %v703
          %804 = vst [vmem:[#allocation3 + $0x50] sm:$0xff] %v708
          %805 = vst [vmem:[#allocation3 + $0x58] sm:$0xff] %v711
          %806 = vst [vmem:[#allocation3 + $0x60] sm:$0xff] %v716
          %807 = vst [vmem:[#allocation3 + $0x68] sm:$0xff] %v719
          %808 = vst [vmem:[#allocation3 + $0x70] sm:$0xff] %v724
          %809 = vst [vmem:[#allocation3 + $0x78] sm:$0xff] %v727
          %810 = vst [vmem:[#allocation3 + $0x80] sm:$0xff] %v732
          %811 = vst [vmem:[#allocation3 + $0x88] sm:$0xff] %v735
          %812 = vst [vmem:[#allocation3 + $0x90] sm:$0xff] %v740
          %813 = vst [vmem:[#allocation3 + $0x98] sm:$0xff] %v743
          %814 = vst [vmem:[#allocation3 + $0xa0] sm:$0xff] %v748
          %815 = vst [vmem:[#allocation3 + $0xa8] sm:$0xff] %v751
          %816 = vst [vmem:[#allocation3 + $0xb0] sm:$0xff] %v756
          %817 = vst [vmem:[#allocation3 + $0xb8] sm:$0xff] %v759
          %818 = vst [vmem:[#allocation3 + $0xc0] sm:$0xff] %v764
          %819 = vst [vmem:[#allocation3 + $0xc8] sm:$0xff] %v767
          %820 = vst [vmem:[#allocation3 + $0xd0] sm:$0xff] %v772
          %821 = vst [vmem:[#allocation3 + $0xd8] sm:$0xff] %v775
          %822 = vst [vmem:[#allocation3 + $0xe0] sm:$0xff] %v780
          %823 = vst [vmem:[#allocation3 + $0xe8] sm:$0xff] %v783
          %824 = vst [vmem:[#allocation3 + $0xf0] sm:$0xff] %v788
          %825 = vst [vmem:[#allocation3 + $0xf8] sm:$0xff] %v791
        $region72: #{tpu_custom_call.1} parent=43 // pred_fallthru
          _
        // Predicated region
        $region73: #{tpu_custom_call.1} parent=43 // pred_check
          %p826 = pneg %p429
        $region74: #{tpu_custom_call.1} parent=43 // pred_check_branch
          %828 = sbr.rel (%p826) target = $region76
        $region75: #{tpu_custom_call.1} parent=43 // pred_region
          %829 = vst [vmem:[#allocation2] sm:$0xff] 0.0
          %830 = vst [vmem:[#allocation2 + $0x8] sm:$0xff] 0.0
          %831 = vst [vmem:[#allocation2 + $0x10] sm:$0xff] 0.0
          %832 = vst [vmem:[#allocation2 + $0x18] sm:$0xff] 0.0
          %833 = vst [vmem:[#allocation2 + $0x20] sm:$0xff] 0.0
          %834 = vst [vmem:[#allocation2 + $0x28] sm:$0xff] 0.0
          %835 = vst [vmem:[#allocation2 + $0x30] sm:$0xff] 0.0
          %836 = vst [vmem:[#allocation2 + $0x38] sm:$0xff] 0.0
          %837 = vst [vmem:[#allocation2 + $0x40] sm:$0xff] 0.0
          %838 = vst [vmem:[#allocation2 + $0x48] sm:$0xff] 0.0
          %839 = vst [vmem:[#allocation2 + $0x50] sm:$0xff] 0.0
          %840 = vst [vmem:[#allocation2 + $0x58] sm:$0xff] 0.0
          %841 = vst [vmem:[#allocation2 + $0x60] sm:$0xff] 0.0
          %842 = vst [vmem:[#allocation2 + $0x68] sm:$0xff] 0.0
          %843 = vst [vmem:[#allocation2 + $0x70] sm:$0xff] 0.0
          %844 = vst [vmem:[#allocation2 + $0x78] sm:$0xff] 0.0
          %845 = vst [vmem:[#allocation2 + $0x80] sm:$0xff] 0.0
          %846 = vst [vmem:[#allocation2 + $0x88] sm:$0xff] 0.0
          %847 = vst [vmem:[#allocation2 + $0x90] sm:$0xff] 0.0
          %848 = vst [vmem:[#allocation2 + $0x98] sm:$0xff] 0.0
          %849 = vst [vmem:[#allocation2 + $0xa0] sm:$0xff] 0.0
          %850 = vst [vmem:[#allocation2 + $0xa8] sm:$0xff] 0.0
          %851 = vst [vmem:[#allocation2 + $0xb0] sm:$0xff] 0.0
          %852 = vst [vmem:[#allocation2 + $0xb8] sm:$0xff] 0.0
          %853 = vst [vmem:[#allocation2 + $0xc0] sm:$0xff] 0.0
          %854 = vst [vmem:[#allocation2 + $0xc8] sm:$0xff] 0.0
          %855 = vst [vmem:[#allocation2 + $0xd0] sm:$0xff] 0.0
          %856 = vst [vmem:[#allocation2 + $0xd8] sm:$0xff] 0.0
          %857 = vst [vmem:[#allocation2 + $0xe0] sm:$0xff] 0.0
          %858 = vst [vmem:[#allocation2 + $0xe8] sm:$0xff] 0.0
          %859 = vst [vmem:[#allocation2 + $0xf0] sm:$0xff] 0.0
          %860 = vst [vmem:[#allocation2 + $0xf8] sm:$0xff] 0.0
        $region76: #{tpu_custom_call.1} parent=43 // pred_fallthru
          _
        %v861 = vld [vmem:[#allocation2] sm:$0xff]
        %v862 = vld [vmem:[#allocation2 + $0x8] sm:$0xff]
        %v863 = vld [vmem:[#allocation2 + $0x10] sm:$0xff]
        %v864 = vld [vmem:[#allocation2 + $0x18] sm:$0xff]
        %v865 = vld [vmem:[#allocation2 + $0x20] sm:$0xff]
        %v866 = vld [vmem:[#allocation2 + $0x28] sm:$0xff]
        %v867 = vld [vmem:[#allocation2 + $0x30] sm:$0xff]
        %v868 = vld [vmem:[#allocation2 + $0x38] sm:$0xff]
        %v869 = vld [vmem:[#allocation2 + $0x40] sm:$0xff]
        %v870 = vld [vmem:[#allocation2 + $0x48] sm:$0xff]
        %v871 = vld [vmem:[#allocation2 + $0x50] sm:$0xff]
        %v872 = vld [vmem:[#allocation2 + $0x58] sm:$0xff]
        %v873 = vld [vmem:[#allocation2 + $0x60] sm:$0xff]
        %v874 = vld [vmem:[#allocation2 + $0x68] sm:$0xff]
        %v875 = vld [vmem:[#allocation2 + $0x70] sm:$0xff]
        %v876 = vld [vmem:[#allocation2 + $0x78] sm:$0xff]
        %v877 = vld [vmem:[#allocation2 + $0x80] sm:$0xff]
        %v878 = vld [vmem:[#allocation2 + $0x88] sm:$0xff]
        %v879 = vld [vmem:[#allocation2 + $0x90] sm:$0xff]
        %v880 = vld [vmem:[#allocation2 + $0x98] sm:$0xff]
        %v881 = vld [vmem:[#allocation2 + $0xa0] sm:$0xff]
        %v882 = vld [vmem:[#allocation2 + $0xa8] sm:$0xff]
        %v883 = vld [vmem:[#allocation2 + $0xb0] sm:$0xff]
        %v884 = vld [vmem:[#allocation2 + $0xb8] sm:$0xff]
        %v885 = vld [vmem:[#allocation2 + $0xc0] sm:$0xff]
        %v886 = vld [vmem:[#allocation2 + $0xc8] sm:$0xff]
        %v887 = vld [vmem:[#allocation2 + $0xd0] sm:$0xff]
        %v888 = vld [vmem:[#allocation2 + $0xd8] sm:$0xff]
        %v889 = vld [vmem:[#allocation2 + $0xe0] sm:$0xff]
        %v890 = vld [vmem:[#allocation2 + $0xe8] sm:$0xff]
        %v891 = vld [vmem:[#allocation2 + $0xf0] sm:$0xff]
        %v892 = vld [vmem:[#allocation2 + $0xf8] sm:$0xff]
        %v893 = vld [vmem:[%s353] sm:$0xff]
        %v894 = vld [vmem:[%s353 + $0x8] sm:$0xff]
        %v895 = vld [vmem:[%s353 + $0x10] sm:$0xff]
        %v896 = vld [vmem:[%s353 + $0x18] sm:$0xff]
        %v897 = vld [vmem:[%s353 + $0x20] sm:$0xff]
        %v898 = vld [vmem:[%s353 + $0x28] sm:$0xff]
        %v899 = vld [vmem:[%s353 + $0x30] sm:$0xff]
        %v900 = vld [vmem:[%s353 + $0x38] sm:$0xff]
        %v901 = vld [vmem:[%s353 + $0x40] sm:$0xff]
        %v902 = vld [vmem:[%s353 + $0x48] sm:$0xff]
        %v903 = vld [vmem:[%s353 + $0x50] sm:$0xff]
        %v904 = vld [vmem:[%s353 + $0x58] sm:$0xff]
        %v905 = vld [vmem:[%s353 + $0x60] sm:$0xff]
        %v906 = vld [vmem:[%s353 + $0x68] sm:$0xff]
        %v907 = vld [vmem:[%s353 + $0x70] sm:$0xff]
        %v908 = vld [vmem:[%s353 + $0x78] sm:$0xff]
        %v909 = vld [vmem:[%s353 + $0x80] sm:$0xff]
        %v910 = vld [vmem:[%s353 + $0x88] sm:$0xff]
        %v911 = vld [vmem:[%s353 + $0x90] sm:$0xff]
        %v912 = vld [vmem:[%s353 + $0x98] sm:$0xff]
        %v913 = vld [vmem:[%s353 + $0xa0] sm:$0xff]
        %v914 = vld [vmem:[%s353 + $0xa8] sm:$0xff]
        %v915 = vld [vmem:[%s353 + $0xb0] sm:$0xff]
        %v916 = vld [vmem:[%s353 + $0xb8] sm:$0xff]
        %v917 = vld [vmem:[%s353 + $0xc0] sm:$0xff]
        %v918 = vld [vmem:[%s353 + $0xc8] sm:$0xff]
        %v919 = vld [vmem:[%s353 + $0xd0] sm:$0xff]
        %v920 = vld [vmem:[%s353 + $0xd8] sm:$0xff]
        %v921 = vld [vmem:[%s353 + $0xe0] sm:$0xff]
        %v922 = vld [vmem:[%s353 + $0xe8] sm:$0xff]
        %v923 = vld [vmem:[%s353 + $0xf0] sm:$0xff]
        %v924 = vld [vmem:[%s353 + $0xf8] sm:$0xff]
        %v925 = vld [vmem:[%s353 + $0x100] sm:$0xff]
        %v926 = vld [vmem:[%s353 + $0x108] sm:$0xff]
        %v927 = vld [vmem:[%s353 + $0x110] sm:$0xff]
        %v928 = vld [vmem:[%s353 + $0x118] sm:$0xff]
        %v929 = vld [vmem:[%s353 + $0x120] sm:$0xff]
        %v930 = vld [vmem:[%s353 + $0x128] sm:$0xff]
        %v931 = vld [vmem:[%s353 + $0x130] sm:$0xff]
        %v932 = vld [vmem:[%s353 + $0x138] sm:$0xff]
        %v933 = vld [vmem:[%s353 + $0x140] sm:$0xff]
        %v934 = vld [vmem:[%s353 + $0x148] sm:$0xff]
        %v935 = vld [vmem:[%s353 + $0x150] sm:$0xff]
        %v936 = vld [vmem:[%s353 + $0x158] sm:$0xff]
        %v937 = vld [vmem:[%s353 + $0x160] sm:$0xff]
        %v938 = vld [vmem:[%s353 + $0x168] sm:$0xff]
        %v939 = vld [vmem:[%s353 + $0x170] sm:$0xff]
        %v940 = vld [vmem:[%s353 + $0x178] sm:$0xff]
        %v941 = vld [vmem:[%s353 + $0x180] sm:$0xff]
        %v942 = vld [vmem:[%s353 + $0x188] sm:$0xff]
        %v943 = vld [vmem:[%s353 + $0x190] sm:$0xff]
        %v944 = vld [vmem:[%s353 + $0x198] sm:$0xff]
        %v945 = vld [vmem:[%s353 + $0x1a0] sm:$0xff]
        %v946 = vld [vmem:[%s353 + $0x1a8] sm:$0xff]
        %v947 = vld [vmem:[%s353 + $0x1b0] sm:$0xff]
        %v948 = vld [vmem:[%s353 + $0x1b8] sm:$0xff]
        %v949 = vld [vmem:[%s353 + $0x1c0] sm:$0xff]
        %v950 = vld [vmem:[%s353 + $0x1c8] sm:$0xff]
        %v951 = vld [vmem:[%s353 + $0x1d0] sm:$0xff]
        %v952 = vld [vmem:[%s353 + $0x1d8] sm:$0xff]
        %v953 = vld [vmem:[%s353 + $0x1e0] sm:$0xff]
        %v954 = vld [vmem:[%s353 + $0x1e8] sm:$0xff]
        %v955 = vld [vmem:[%s353 + $0x1f0] sm:$0xff]
        %v956 = vld [vmem:[%s353 + $0x1f8] sm:$0xff]
        %v957 = vld [vmem:[#allocation7] sm:$0xf]
        %v958 = vld [vmem:[#allocation7 + $0x4] sm:$0xf]
        %v959 = vld [vmem:[#allocation7 + $0x8] sm:$0xf]
        %v960 = vld [vmem:[#allocation7 + $0xc] sm:$0xf]
        %v961 = vld [vmem:[#allocation7 + $0x10] sm:$0xf]
        %v962 = vld [vmem:[#allocation7 + $0x14] sm:$0xf]
        %v963 = vld [vmem:[#allocation7 + $0x18] sm:$0xf]
        %v964 = vld [vmem:[#allocation7 + $0x1c] sm:$0xf]
        %v965 = vld [vmem:[#allocation7 + $0x20] sm:$0xf]
        %v966 = vld [vmem:[#allocation7 + $0x24] sm:$0xf]
        %v967 = vld [vmem:[#allocation7 + $0x28] sm:$0xf]
        %v968 = vld [vmem:[#allocation7 + $0x2c] sm:$0xf]
        %v969 = vld [vmem:[#allocation7 + $0x30] sm:$0xf]
        %v970 = vld [vmem:[#allocation7 + $0x34] sm:$0xf]
        %v971 = vld [vmem:[#allocation7 + $0x38] sm:$0xf]
        %v972 = vld [vmem:[#allocation7 + $0x3c] sm:$0xf]
        %v973 = vld [vmem:[#allocation7 + $0x40] sm:$0xf]
        %v974 = vld [vmem:[#allocation7 + $0x44] sm:$0xf]
        %v975 = vld [vmem:[#allocation7 + $0x48] sm:$0xf]
        %v976 = vld [vmem:[#allocation7 + $0x4c] sm:$0xf]
        %v977 = vld [vmem:[#allocation7 + $0x50] sm:$0xf]
        %v978 = vld [vmem:[#allocation7 + $0x54] sm:$0xf]
        %v979 = vld [vmem:[#allocation7 + $0x58] sm:$0xf]
        %v980 = vld [vmem:[#allocation7 + $0x5c] sm:$0xf]
        %v981 = vld [vmem:[#allocation7 + $0x60] sm:$0xf]
        %v982 = vld [vmem:[#allocation7 + $0x64] sm:$0xf]
        %v983 = vld [vmem:[#allocation7 + $0x68] sm:$0xf]
        %v984 = vld [vmem:[#allocation7 + $0x6c] sm:$0xf]
        %v985 = vld [vmem:[#allocation7 + $0x70] sm:$0xf]
        %v986 = vld [vmem:[#allocation7 + $0x74] sm:$0xf]
        %v987 = vld [vmem:[#allocation7 + $0x78] sm:$0xf]
        %v988 = vld [vmem:[#allocation7 + $0x7c] sm:$0xf]
        %v989 = vld [vmem:[#allocation7 + $0x80] sm:$0xf]
        %v990 = vld [vmem:[#allocation7 + $0x84] sm:$0xf]
        %v991 = vld [vmem:[#allocation7 + $0x88] sm:$0xf]
        %v992 = vld [vmem:[#allocation7 + $0x8c] sm:$0xf]
        %v993 = vld [vmem:[#allocation7 + $0x90] sm:$0xf]
        %v994 = vld [vmem:[#allocation7 + $0x94] sm:$0xf]
        %v995 = vld [vmem:[#allocation7 + $0x98] sm:$0xf]
        %v996 = vld [vmem:[#allocation7 + $0x9c] sm:$0xf]
        %v997 = vld [vmem:[#allocation7 + $0xa0] sm:$0xf]
        %v998 = vld [vmem:[#allocation7 + $0xa4] sm:$0xf]
        %v999 = vld [vmem:[#allocation7 + $0xa8] sm:$0xf]
        %v1000 = vld [vmem:[#allocation7 + $0xac] sm:$0xf]
        %v1001 = vld [vmem:[#allocation7 + $0xb0] sm:$0xf]
        %v1002 = vld [vmem:[#allocation7 + $0xb4] sm:$0xf]
        %v1003 = vld [vmem:[#allocation7 + $0xb8] sm:$0xf]
        %v1004 = vld [vmem:[#allocation7 + $0xbc] sm:$0xf]
        %v1005 = vld [vmem:[#allocation7 + $0xc0] sm:$0xf]
        %v1006 = vld [vmem:[#allocation7 + $0xc4] sm:$0xf]
        %v1007 = vld [vmem:[#allocation7 + $0xc8] sm:$0xf]
        %v1008 = vld [vmem:[#allocation7 + $0xcc] sm:$0xf]
        %v1009 = vld [vmem:[#allocation7 + $0xd0] sm:$0xf]
        %v1010 = vld [vmem:[#allocation7 + $0xd4] sm:$0xf]
        %v1011 = vld [vmem:[#allocation7 + $0xd8] sm:$0xf]
        %v1012 = vld [vmem:[#allocation7 + $0xdc] sm:$0xf]
        %v1013 = vld [vmem:[#allocation7 + $0xe0] sm:$0xf]
        %v1014 = vld [vmem:[#allocation7 + $0xe4] sm:$0xf]
        %v1015 = vld [vmem:[#allocation7 + $0xe8] sm:$0xf]
        %v1016 = vld [vmem:[#allocation7 + $0xec] sm:$0xf]
        %v1017 = vld [vmem:[#allocation7 + $0xf0] sm:$0xf]
        %v1018 = vld [vmem:[#allocation7 + $0xf4] sm:$0xf]
        %v1019 = vld [vmem:[#allocation7 + $0xf8] sm:$0xf]
        %v1020 = vld [vmem:[#allocation7 + $0xfc] sm:$0xf]
        %v1085 = vunpack.c.l.b16 %v893
        %v1086 = vunpack.c.h.b16 %v893
        %v1087 = vunpack.c.l.b16 %v894
        %v1088 = vunpack.c.h.b16 %v894
        %v1089 = vunpack.c.l.b16 %v895
        %v1090 = vunpack.c.h.b16 %v895
        %v1091 = vunpack.c.l.b16 %v896
        %v1092 = vunpack.c.h.b16 %v896
        %v1093 = vunpack.c.l.b16 %v897
        %v1094 = vunpack.c.h.b16 %v897
        %v1095 = vunpack.c.l.b16 %v898
        %v1096 = vunpack.c.h.b16 %v898
        %v1097 = vunpack.c.l.b16 %v899
        %v1098 = vunpack.c.h.b16 %v899
        %v1099 = vunpack.c.l.b16 %v900
        %v1100 = vunpack.c.h.b16 %v900
        %v1101 = vunpack.c.l.b16 %v901
        %v1102 = vunpack.c.h.b16 %v901
        %v1103 = vunpack.c.l.b16 %v902
        %v1104 = vunpack.c.h.b16 %v902
        %v1105 = vunpack.c.l.b16 %v903
        %v1106 = vunpack.c.h.b16 %v903
        %v1107 = vunpack.c.l.b16 %v904
        %v1108 = vunpack.c.h.b16 %v904
        %v1109 = vunpack.c.l.b16 %v905
        %v1110 = vunpack.c.h.b16 %v905
        %v1111 = vunpack.c.l.b16 %v906
        %v1112 = vunpack.c.h.b16 %v906
        %v1113 = vunpack.c.l.b16 %v907
        %v1114 = vunpack.c.h.b16 %v907
        %v1115 = vunpack.c.l.b16 %v908
        %v1116 = vunpack.c.h.b16 %v908
        %v1117 = vunpack.c.l.b16 %v909
        %v1118 = vunpack.c.h.b16 %v909
        %v1119 = vunpack.c.l.b16 %v910
        %v1120 = vunpack.c.h.b16 %v910
        %v1121 = vunpack.c.l.b16 %v911
        %v1122 = vunpack.c.h.b16 %v911
        %v1123 = vunpack.c.l.b16 %v912
        %v1124 = vunpack.c.h.b16 %v912
        %v1125 = vunpack.c.l.b16 %v913
        %v1126 = vunpack.c.h.b16 %v913
        %v1127 = vunpack.c.l.b16 %v914
        %v1128 = vunpack.c.h.b16 %v914
        %v1129 = vunpack.c.l.b16 %v915
        %v1130 = vunpack.c.h.b16 %v915
        %v1131 = vunpack.c.l.b16 %v916
        %v1132 = vunpack.c.h.b16 %v916
        %v1133 = vunpack.c.l.b16 %v917
        %v1134 = vunpack.c.h.b16 %v917
        %v1135 = vunpack.c.l.b16 %v918
        %v1136 = vunpack.c.h.b16 %v918
        %v1137 = vunpack.c.l.b16 %v919
        %v1138 = vunpack.c.h.b16 %v919
        %v1139 = vunpack.c.l.b16 %v920
        %v1140 = vunpack.c.h.b16 %v920
        %v1141 = vunpack.c.l.b16 %v921
        %v1142 = vunpack.c.h.b16 %v921
        %v1143 = vunpack.c.l.b16 %v922
        %v1144 = vunpack.c.h.b16 %v922
        %v1145 = vunpack.c.l.b16 %v923
        %v1146 = vunpack.c.h.b16 %v923
        %v1147 = vunpack.c.l.b16 %v924
        %v1148 = vunpack.c.h.b16 %v924
        %v1149 = vunpack.c.l.b16 %v925
        %v1150 = vunpack.c.h.b16 %v925
        %v1151 = vunpack.c.l.b16 %v926
        %v1152 = vunpack.c.h.b16 %v926
        %v1153 = vunpack.c.l.b16 %v927
        %v1154 = vunpack.c.h.b16 %v927
        %v1155 = vunpack.c.l.b16 %v928
        %v1156 = vunpack.c.h.b16 %v928
        %v1157 = vunpack.c.l.b16 %v929
        %v1158 = vunpack.c.h.b16 %v929
        %v1159 = vunpack.c.l.b16 %v930
        %v1160 = vunpack.c.h.b16 %v930
        %v1161 = vunpack.c.l.b16 %v931
        %v1162 = vunpack.c.h.b16 %v931
        %v1163 = vunpack.c.l.b16 %v932
        %v1164 = vunpack.c.h.b16 %v932
        %v1165 = vunpack.c.l.b16 %v933
        %v1166 = vunpack.c.h.b16 %v933
        %v1167 = vunpack.c.l.b16 %v934
        %v1168 = vunpack.c.h.b16 %v934
        %v1169 = vunpack.c.l.b16 %v935
        %v1170 = vunpack.c.h.b16 %v935
        %v1171 = vunpack.c.l.b16 %v936
        %v1172 = vunpack.c.h.b16 %v936
        %v1173 = vunpack.c.l.b16 %v937
        %v1174 = vunpack.c.h.b16 %v937
        %v1175 = vunpack.c.l.b16 %v938
        %v1176 = vunpack.c.h.b16 %v938
        %v1177 = vunpack.c.l.b16 %v939
        %v1178 = vunpack.c.h.b16 %v939
        %v1179 = vunpack.c.l.b16 %v940
        %v1180 = vunpack.c.h.b16 %v940
        %v1181 = vunpack.c.l.b16 %v941
        %v1182 = vunpack.c.h.b16 %v941
        %v1183 = vunpack.c.l.b16 %v942
        %v1184 = vunpack.c.h.b16 %v942
        %v1185 = vunpack.c.l.b16 %v943
        %v1186 = vunpack.c.h.b16 %v943
        %v1187 = vunpack.c.l.b16 %v944
        %v1188 = vunpack.c.h.b16 %v944
        %v1189 = vunpack.c.l.b16 %v945
        %v1190 = vunpack.c.h.b16 %v945
        %v1191 = vunpack.c.l.b16 %v946
        %v1192 = vunpack.c.h.b16 %v946
        %v1193 = vunpack.c.l.b16 %v947
        %v1194 = vunpack.c.h.b16 %v947
        %v1195 = vunpack.c.l.b16 %v948
        %v1196 = vunpack.c.h.b16 %v948
        %v1197 = vunpack.c.l.b16 %v949
        %v1198 = vunpack.c.h.b16 %v949
        %v1199 = vunpack.c.l.b16 %v950
        %v1200 = vunpack.c.h.b16 %v950
        %v1201 = vunpack.c.l.b16 %v951
        %v1202 = vunpack.c.h.b16 %v951
        %v1203 = vunpack.c.l.b16 %v952
        %v1204 = vunpack.c.h.b16 %v952
        %v1205 = vunpack.c.l.b16 %v953
        %v1206 = vunpack.c.h.b16 %v953
        %v1207 = vunpack.c.l.b16 %v954
        %v1208 = vunpack.c.h.b16 %v954
        %v1209 = vunpack.c.l.b16 %v955
        %v1210 = vunpack.c.h.b16 %v955
        %v1211 = vunpack.c.l.b16 %v956
        %v1212 = vunpack.c.h.b16 %v956
        %v1213 = vpack.c.b16 %v1089, %v1085
        %v1214 = vpack.c.b16 %v1090, %v1086
        %v1215 = vpack.c.b16 %v1091, %v1087
        %v1216 = vpack.c.b16 %v1092, %v1088
        %v1217 = vpack.c.b16 %v1097, %v1093
        %v1218 = vpack.c.b16 %v1098, %v1094
        %v1219 = vpack.c.b16 %v1099, %v1095
        %v1220 = vpack.c.b16 %v1100, %v1096
        %v1221 = vpack.c.b16 %v1105, %v1101
        %v1222 = vpack.c.b16 %v1106, %v1102
        %v1223 = vpack.c.b16 %v1107, %v1103
        %v1224 = vpack.c.b16 %v1108, %v1104
        %v1225 = vpack.c.b16 %v1113, %v1109
        %v1226 = vpack.c.b16 %v1114, %v1110
        %v1227 = vpack.c.b16 %v1115, %v1111
        %v1228 = vpack.c.b16 %v1116, %v1112
        %v1229 = vpack.c.b16 %v1121, %v1117
        %v1230 = vpack.c.b16 %v1122, %v1118
        %v1231 = vpack.c.b16 %v1123, %v1119
        %v1232 = vpack.c.b16 %v1124, %v1120
        %v1233 = vpack.c.b16 %v1129, %v1125
        %v1234 = vpack.c.b16 %v1130, %v1126
        %v1235 = vpack.c.b16 %v1131, %v1127
        %v1236 = vpack.c.b16 %v1132, %v1128
        %v1237 = vpack.c.b16 %v1137, %v1133
        %v1238 = vpack.c.b16 %v1138, %v1134
        %v1239 = vpack.c.b16 %v1139, %v1135
        %v1240 = vpack.c.b16 %v1140, %v1136
        %v1241 = vpack.c.b16 %v1145, %v1141
        %v1242 = vpack.c.b16 %v1146, %v1142
        %v1243 = vpack.c.b16 %v1147, %v1143
        %v1244 = vpack.c.b16 %v1148, %v1144
        %v1245 = vpack.c.b16 %v1153, %v1149
        %v1246 = vpack.c.b16 %v1154, %v1150
        %v1247 = vpack.c.b16 %v1155, %v1151
        %v1248 = vpack.c.b16 %v1156, %v1152
        %v1249 = vpack.c.b16 %v1161, %v1157
        %v1250 = vpack.c.b16 %v1162, %v1158
        %v1251 = vpack.c.b16 %v1163, %v1159
        %v1252 = vpack.c.b16 %v1164, %v1160
        %v1253 = vpack.c.b16 %v1169, %v1165
        %v1254 = vpack.c.b16 %v1170, %v1166
        %v1255 = vpack.c.b16 %v1171, %v1167
        %v1256 = vpack.c.b16 %v1172, %v1168
        %v1257 = vpack.c.b16 %v1177, %v1173
        %v1258 = vpack.c.b16 %v1178, %v1174
        %v1259 = vpack.c.b16 %v1179, %v1175
        %v1260 = vpack.c.b16 %v1180, %v1176
        %v1261 = vpack.c.b16 %v1185, %v1181
        %v1262 = vpack.c.b16 %v1186, %v1182
        %v1263 = vpack.c.b16 %v1187, %v1183
        %v1264 = vpack.c.b16 %v1188, %v1184
        %v1265 = vpack.c.b16 %v1193, %v1189
        %v1266 = vpack.c.b16 %v1194, %v1190
        %v1267 = vpack.c.b16 %v1195, %v1191
        %v1268 = vpack.c.b16 %v1196, %v1192
        %v1269 = vpack.c.b16 %v1201, %v1197
        %v1270 = vpack.c.b16 %v1202, %v1198
        %v1271 = vpack.c.b16 %v1203, %v1199
        %v1272 = vpack.c.b16 %v1204, %v1200
        %v1273 = vpack.c.b16 %v1209, %v1205
        %v1274 = vpack.c.b16 %v1210, %v1206
        %v1275 = vpack.c.b16 %v1211, %v1207
        %v1276 = vpack.c.b16 %v1212, %v1208
        %v1405 = vunpack.c.l.b16 %v957
        %v1406 = vunpack.c.l.b16 %v958
        %v1407 = vunpack.c.l.b16 %v959
        %v1408 = vunpack.c.l.b16 %v960
        %v1409 = vunpack.c.l.b16 %v961
        %v1410 = vunpack.c.l.b16 %v962
        %v1411 = vunpack.c.l.b16 %v963
        %v1412 = vunpack.c.l.b16 %v964
        %v1413 = vunpack.c.l.b16 %v965
        %v1414 = vunpack.c.l.b16 %v966
        %v1415 = vunpack.c.l.b16 %v967
        %v1416 = vunpack.c.l.b16 %v968
        %v1417 = vunpack.c.l.b16 %v969
        %v1418 = vunpack.c.l.b16 %v970
        %v1419 = vunpack.c.l.b16 %v971
        %v1420 = vunpack.c.l.b16 %v972
        %v1421 = vunpack.c.l.b16 %v973
        %v1422 = vunpack.c.l.b16 %v974
        %v1423 = vunpack.c.l.b16 %v975
        %v1424 = vunpack.c.l.b16 %v976
        %v1425 = vunpack.c.l.b16 %v977
        %v1426 = vunpack.c.l.b16 %v978
        %v1427 = vunpack.c.l.b16 %v979
        %v1428 = vunpack.c.l.b16 %v980
        %v1429 = vunpack.c.l.b16 %v981
        %v1430 = vunpack.c.l.b16 %v982
        %v1431 = vunpack.c.l.b16 %v983
        %v1432 = vunpack.c.l.b16 %v984
        %v1433 = vunpack.c.l.b16 %v985
        %v1434 = vunpack.c.l.b16 %v986
        %v1435 = vunpack.c.l.b16 %v987
        %v1436 = vunpack.c.l.b16 %v988
        %v1437 = vunpack.c.l.b16 %v989
        %v1438 = vunpack.c.l.b16 %v990
        %v1439 = vunpack.c.l.b16 %v991
        %v1440 = vunpack.c.l.b16 %v992
        %v1441 = vunpack.c.l.b16 %v993
        %v1442 = vunpack.c.l.b16 %v994
        %v1443 = vunpack.c.l.b16 %v995
        %v1444 = vunpack.c.l.b16 %v996
        %v1445 = vunpack.c.l.b16 %v997
        %v1446 = vunpack.c.l.b16 %v998
        %v1447 = vunpack.c.l.b16 %v999
        %v1448 = vunpack.c.l.b16 %v1000
        %v1449 = vunpack.c.l.b16 %v1001
        %v1450 = vunpack.c.l.b16 %v1002
        %v1451 = vunpack.c.l.b16 %v1003
        %v1452 = vunpack.c.l.b16 %v1004
        %v1453 = vunpack.c.l.b16 %v1005
        %v1454 = vunpack.c.l.b16 %v1006
        %v1455 = vunpack.c.l.b16 %v1007
        %v1456 = vunpack.c.l.b16 %v1008
        %v1457 = vunpack.c.l.b16 %v1009
        %v1458 = vunpack.c.l.b16 %v1010
        %v1459 = vunpack.c.l.b16 %v1011
        %v1460 = vunpack.c.l.b16 %v1012
        %v1461 = vunpack.c.l.b16 %v1013
        %v1462 = vunpack.c.l.b16 %v1014
        %v1463 = vunpack.c.l.b16 %v1015
        %v1464 = vunpack.c.l.b16 %v1016
        %v1465 = vunpack.c.l.b16 %v1017
        %v1466 = vunpack.c.l.b16 %v1018
        %v1467 = vunpack.c.l.b16 %v1019
        %v1468 = vunpack.c.l.b16 %v1020
        %v1469 = vpack.c.b16 %v1406, %v1405
        %v1470 = vpack.c.b16 %v1408, %v1407
        %v1471 = vpack.c.b16 %v1410, %v1409
        %v1472 = vpack.c.b16 %v1412, %v1411
        %v1473 = vpack.c.b16 %v1414, %v1413
        %v1474 = vpack.c.b16 %v1416, %v1415
        %v1475 = vpack.c.b16 %v1418, %v1417
        %v1476 = vpack.c.b16 %v1420, %v1419
        %v1477 = vpack.c.b16 %v1422, %v1421
        %v1478 = vpack.c.b16 %v1424, %v1423
        %v1479 = vpack.c.b16 %v1426, %v1425
        %v1480 = vpack.c.b16 %v1428, %v1427
        %v1481 = vpack.c.b16 %v1430, %v1429
        %v1482 = vpack.c.b16 %v1432, %v1431
        %v1483 = vpack.c.b16 %v1434, %v1433
        %v1484 = vpack.c.b16 %v1436, %v1435
        %v1485 = vpack.c.b16 %v1438, %v1437
        %v1486 = vpack.c.b16 %v1440, %v1439
        %v1487 = vpack.c.b16 %v1442, %v1441
        %v1488 = vpack.c.b16 %v1444, %v1443
        %v1489 = vpack.c.b16 %v1446, %v1445
        %v1490 = vpack.c.b16 %v1448, %v1447
        %v1491 = vpack.c.b16 %v1450, %v1449
        %v1492 = vpack.c.b16 %v1452, %v1451
        %v1493 = vpack.c.b16 %v1454, %v1453
        %v1494 = vpack.c.b16 %v1456, %v1455
        %v1495 = vpack.c.b16 %v1458, %v1457
        %v1496 = vpack.c.b16 %v1460, %v1459
        %v1497 = vpack.c.b16 %v1462, %v1461
        %v1498 = vpack.c.b16 %v1464, %v1463
        %v1499 = vpack.c.b16 %v1466, %v1465
        %v1500 = vpack.c.b16 %v1468, %v1467
        %1533 = vmatprep.subr.bf16.mxu0 0
        %1534 = vmatpush1.bf16.msra.mxu0 %v1476
        %1535 = vmatprep.subr.bf16.mxu0 0
        %1536 = vmatpush1.bf16.msra.mxu0 %v1475
        %1537 = vmatprep.subr.bf16.mxu0 0
        %1538 = vmatpush1.bf16.msra.mxu0 %v1474
        %1539 = vmatprep.subr.bf16.mxu0 0
        %1540 = vmatpush1.bf16.msra.mxu0 %v1473
        %1541 = vmatprep.subr.bf16.mxu0 0
        %1542 = vmatpush1.bf16.msra.mxu0 %v1472
        %1543 = vmatprep.subr.bf16.mxu0 0
        %1544 = vmatpush1.bf16.msra.mxu0 %v1471
        %1545 = vmatprep.subr.bf16.mxu0 0
        %1546 = vmatpush1.bf16.msra.mxu0 %v1470
        %1547 = vmatprep.subr.bf16.mxu0 0
        %1548 = vmatpush1.bf16.msra.mxu0 %v1469
        %1549 = vmatprep.subr.bf16.mxu0 0
        %1550 = vmatpush2.bf16.msra.mxu0 %v1484
        %1551 = vmatprep.subr.bf16.mxu0 0
        %1552 = vmatpush2.bf16.msra.mxu0 %v1483
        %1553 = vmatprep.subr.bf16.mxu0 0
        %1554 = vmatpush2.bf16.msra.mxu0 %v1482
        %1555 = vmatprep.subr.bf16.mxu0 0
        %1556 = vmatpush2.bf16.msra.mxu0 %v1481
        %1557 = vmatprep.subr.bf16.mxu0 0
        %1558 = vmatpush2.bf16.msra.mxu0 %v1480
        %1559 = vmatprep.subr.bf16.mxu0 0
        %1560 = vmatpush2.bf16.msra.mxu0 %v1479
        %1561 = vmatprep.subr.bf16.mxu0 0
        %1562 = vmatpush2.bf16.msra.mxu0 %v1478
        %1563 = vmatprep.subr.bf16.mxu0 0
        %1564 = vmatpush2.bf16.msra.mxu0 %v1477
        %1565 = vmatprep.mubr.bf16.mxu0 %v1214
        %1566 = vmatmul.mubr.bf16.gmra.mxu0 %v1213
        %v1567 = vpop.f32.mrf.mxu0
        %v1568 = vadd.f32 0.0, %v1567
        %v1569 = vpop.f32.mrf.mxu0
        %v1570 = vpop.f32.mrf.mxu0
        %v1571 = vadd.f32 0.0, %v1570
        %v1572 = vpop.f32.mrf.mxu0
        %1573 = vmatprep.mubr.bf16.mxu0 %v1218
        %1574 = vmatmul.mubr.bf16.gmra.mxu0 %v1217
        %v1575 = vpop.f32.mrf.mxu0
        %v1576 = vadd.f32 0.0, %v1575
        %v1577 = vpop.f32.mrf.mxu0
        %v1578 = vpop.f32.mrf.mxu0
        %v1579 = vadd.f32 0.0, %v1578
        %v1580 = vpop.f32.mrf.mxu0
        %1581 = vmatprep.mubr.bf16.mxu0 %v1222
        %1582 = vmatmul.mubr.bf16.gmra.mxu0 %v1221
        %v1583 = vpop.f32.mrf.mxu0
        %v1584 = vadd.f32 0.0, %v1583
        %v1585 = vpop.f32.mrf.mxu0
        %v1586 = vpop.f32.mrf.mxu0
        %v1587 = vadd.f32 0.0, %v1586
        %v1588 = vpop.f32.mrf.mxu0
        %1589 = vmatprep.mubr.bf16.mxu0 %v1226
        %1590 = vmatmul.mubr.bf16.gmra.mxu0 %v1225
        %v1591 = vpop.f32.mrf.mxu0
        %v1592 = vadd.f32 0.0, %v1591
        %v1593 = vpop.f32.mrf.mxu0
        %v1594 = vpop.f32.mrf.mxu0
        %v1595 = vadd.f32 0.0, %v1594
        %v1596 = vpop.f32.mrf.mxu0
        %1597 = vmatprep.mubr.bf16.mxu0 %v1230
        %1598 = vmatmul.mubr.bf16.gmra.mxu0 %v1229
        %v1599 = vpop.f32.mrf.mxu0
        %v1600 = vadd.f32 0.0, %v1599
        %v1601 = vpop.f32.mrf.mxu0
        %v1602 = vpop.f32.mrf.mxu0
        %v1603 = vadd.f32 0.0, %v1602
        %v1604 = vpop.f32.mrf.mxu0
        %1605 = vmatprep.mubr.bf16.mxu0 %v1234
        %1606 = vmatmul.mubr.bf16.gmra.mxu0 %v1233
        %v1607 = vpop.f32.mrf.mxu0
        %v1608 = vadd.f32 0.0, %v1607
        %v1609 = vpop.f32.mrf.mxu0
        %v1610 = vpop.f32.mrf.mxu0
        %v1611 = vadd.f32 0.0, %v1610
        %v1612 = vpop.f32.mrf.mxu0
        %1613 = vmatprep.mubr.bf16.mxu0 %v1238
        %1614 = vmatmul.mubr.bf16.gmra.mxu0 %v1237
        %v1615 = vpop.f32.mrf.mxu0
        %v1616 = vadd.f32 0.0, %v1615
        %v1617 = vpop.f32.mrf.mxu0
        %v1618 = vpop.f32.mrf.mxu0
        %v1619 = vadd.f32 0.0, %v1618
        %v1620 = vpop.f32.mrf.mxu0
        %1621 = vmatprep.mubr.bf16.mxu0 %v1242
        %1622 = vmatmul.mubr.bf16.gmra.mxu0 %v1241
        %v1623 = vpop.f32.mrf.mxu0
        %v1624 = vadd.f32 0.0, %v1623
        %v1625 = vpop.f32.mrf.mxu0
        %v1626 = vpop.f32.mrf.mxu0
        %v1627 = vadd.f32 0.0, %v1626
        %v1628 = vpop.f32.mrf.mxu0
        %1629 = vmatprep.mubr.bf16.mxu0 %v1246
        %1630 = vmatmul.mubr.bf16.gmra.mxu0 %v1245
        %v1631 = vpop.f32.mrf.mxu0
        %v1632 = vadd.f32 0.0, %v1631
        %v1633 = vpop.f32.mrf.mxu0
        %v1634 = vpop.f32.mrf.mxu0
        %v1635 = vadd.f32 0.0, %v1634
        %v1636 = vpop.f32.mrf.mxu0
        %1637 = vmatprep.mubr.bf16.mxu0 %v1250
        %1638 = vmatmul.mubr.bf16.gmra.mxu0 %v1249
        %v1639 = vpop.f32.mrf.mxu0
        %v1640 = vadd.f32 0.0, %v1639
        %v1641 = vpop.f32.mrf.mxu0
        %v1642 = vpop.f32.mrf.mxu0
        %v1643 = vadd.f32 0.0, %v1642
        %v1644 = vpop.f32.mrf.mxu0
        %1645 = vmatprep.mubr.bf16.mxu0 %v1254
        %1646 = vmatmul.mubr.bf16.gmra.mxu0 %v1253
        %v1647 = vpop.f32.mrf.mxu0
        %v1648 = vadd.f32 0.0, %v1647
        %v1649 = vpop.f32.mrf.mxu0
        %v1650 = vpop.f32.mrf.mxu0
        %v1651 = vadd.f32 0.0, %v1650
        %v1652 = vpop.f32.mrf.mxu0
        %1653 = vmatprep.mubr.bf16.mxu0 %v1258
        %1654 = vmatmul.mubr.bf16.gmra.mxu0 %v1257
        %v1655 = vpop.f32.mrf.mxu0
        %v1656 = vadd.f32 0.0, %v1655
        %v1657 = vpop.f32.mrf.mxu0
        %v1658 = vpop.f32.mrf.mxu0
        %v1659 = vadd.f32 0.0, %v1658
        %v1660 = vpop.f32.mrf.mxu0
        %1661 = vmatprep.mubr.bf16.mxu0 %v1262
        %1662 = vmatmul.mubr.bf16.gmra.mxu0 %v1261
        %v1663 = vpop.f32.mrf.mxu0
        %v1664 = vadd.f32 0.0, %v1663
        %v1665 = vpop.f32.mrf.mxu0
        %v1666 = vpop.f32.mrf.mxu0
        %v1667 = vadd.f32 0.0, %v1666
        %v1668 = vpop.f32.mrf.mxu0
        %1669 = vmatprep.mubr.bf16.mxu0 %v1266
        %1670 = vmatmul.mubr.bf16.gmra.mxu0 %v1265
        %v1671 = vpop.f32.mrf.mxu0
        %v1672 = vadd.f32 0.0, %v1671
        %v1673 = vpop.f32.mrf.mxu0
        %v1674 = vpop.f32.mrf.mxu0
        %v1675 = vadd.f32 0.0, %v1674
        %v1676 = vpop.f32.mrf.mxu0
        %1677 = vmatprep.mubr.bf16.mxu0 %v1270
        %1678 = vmatmul.mubr.bf16.gmra.mxu0 %v1269
        %v1679 = vpop.f32.mrf.mxu0
        %v1680 = vadd.f32 0.0, %v1679
        %v1681 = vpop.f32.mrf.mxu0
        %v1682 = vpop.f32.mrf.mxu0
        %v1683 = vadd.f32 0.0, %v1682
        %v1684 = vpop.f32.mrf.mxu0
        %1685 = vmatprep.mubr.bf16.mxu0 %v1274
        %1686 = vmatmul.mubr.bf16.gmra.mxu0 %v1273
        %v1687 = vpop.f32.mrf.mxu0
        %v1688 = vadd.f32 0.0, %v1687
        %v1689 = vpop.f32.mrf.mxu0
        %v1690 = vpop.f32.mrf.mxu0
        %v1691 = vadd.f32 0.0, %v1690
        %v1692 = vpop.f32.mrf.mxu0
        %1693 = vdwg.mxu0
        %1694 = vmatprep.subr.bf16.mxu0 0
        %1695 = vmatpush1.bf16.msra.mxu0 %v1492
        %1696 = vmatprep.subr.bf16.mxu0 0
        %1697 = vmatpush1.bf16.msra.mxu0 %v1491
        %1698 = vmatprep.subr.bf16.mxu0 0
        %1699 = vmatpush1.bf16.msra.mxu0 %v1490
        %1700 = vmatprep.subr.bf16.mxu0 0
        %1701 = vmatpush1.bf16.msra.mxu0 %v1489
        %1702 = vmatprep.subr.bf16.mxu0 0
        %1703 = vmatpush1.bf16.msra.mxu0 %v1488
        %1704 = vmatprep.subr.bf16.mxu0 0
        %1705 = vmatpush1.bf16.msra.mxu0 %v1487
        %1706 = vmatprep.subr.bf16.mxu0 0
        %1707 = vmatpush1.bf16.msra.mxu0 %v1486
        %1708 = vmatprep.subr.bf16.mxu0 0
        %1709 = vmatpush1.bf16.msra.mxu0 %v1485
        %1710 = vmatprep.subr.bf16.mxu0 0
        %1711 = vmatpush2.bf16.msra.mxu0 %v1500
        %1712 = vmatprep.subr.bf16.mxu0 0
        %1713 = vmatpush2.bf16.msra.mxu0 %v1499
        %1714 = vmatprep.subr.bf16.mxu0 0
        %1715 = vmatpush2.bf16.msra.mxu0 %v1498
        %1716 = vmatprep.subr.bf16.mxu0 0
        %1717 = vmatpush2.bf16.msra.mxu0 %v1497
        %1718 = vmatprep.subr.bf16.mxu0 0
        %1719 = vmatpush2.bf16.msra.mxu0 %v1496
        %1720 = vmatprep.subr.bf16.mxu0 0
        %1721 = vmatpush2.bf16.msra.mxu0 %v1495
        %1722 = vmatprep.subr.bf16.mxu0 0
        %1723 = vmatpush2.bf16.msra.mxu0 %v1494
        %1724 = vmatprep.subr.bf16.mxu0 0
        %1725 = vmatpush2.bf16.msra.mxu0 %v1493
        %1726 = vmatprep.mubr.bf16.mxu0 %v1216
        %1727 = vmatmul.mubr.bf16.gmra.mxu0 %v1215
        %v1728 = vpop.f32.mrf.mxu0
        %v1729 = vadd.f32 %v1568, %v1728
        %v1730 = vpop.f32.mrf.mxu0
        %v1731 = vpop.f32.mrf.mxu0
        %v1732 = vadd.f32 %v1571, %v1731
        %v1733 = vpop.f32.mrf.mxu0
        %1734 = vmatprep.mubr.bf16.mxu0 %v1220
        %1735 = vmatmul.mubr.bf16.gmra.mxu0 %v1219
        %v1736 = vpop.f32.mrf.mxu0
        %v1737 = vadd.f32 %v1576, %v1736
        %v1738 = vpop.f32.mrf.mxu0
        %v1739 = vpop.f32.mrf.mxu0
        %v1740 = vadd.f32 %v1579, %v1739
        %v1741 = vpop.f32.mrf.mxu0
        %1742 = vmatprep.mubr.bf16.mxu0 %v1224
        %1743 = vmatmul.mubr.bf16.gmra.mxu0 %v1223
        %v1744 = vpop.f32.mrf.mxu0
        %v1745 = vadd.f32 %v1584, %v1744
        %v1746 = vpop.f32.mrf.mxu0
        %v1747 = vpop.f32.mrf.mxu0
        %v1748 = vadd.f32 %v1587, %v1747
        %v1749 = vpop.f32.mrf.mxu0
        %1750 = vmatprep.mubr.bf16.mxu0 %v1228
        %1751 = vmatmul.mubr.bf16.gmra.mxu0 %v1227
        %v1752 = vpop.f32.mrf.mxu0
        %v1753 = vadd.f32 %v1592, %v1752
        %v1754 = vpop.f32.mrf.mxu0
        %v1755 = vpop.f32.mrf.mxu0
        %v1756 = vadd.f32 %v1595, %v1755
        %v1757 = vpop.f32.mrf.mxu0
        %1758 = vmatprep.mubr.bf16.mxu0 %v1232
        %1759 = vmatmul.mubr.bf16.gmra.mxu0 %v1231
        %v1760 = vpop.f32.mrf.mxu0
        %v1761 = vadd.f32 %v1600, %v1760
        %v1762 = vpop.f32.mrf.mxu0
        %v1763 = vpop.f32.mrf.mxu0
        %v1764 = vadd.f32 %v1603, %v1763
        %v1765 = vpop.f32.mrf.mxu0
        %1766 = vmatprep.mubr.bf16.mxu0 %v1236
        %1767 = vmatmul.mubr.bf16.gmra.mxu0 %v1235
        %v1768 = vpop.f32.mrf.mxu0
        %v1769 = vadd.f32 %v1608, %v1768
        %v1770 = vpop.f32.mrf.mxu0
        %v1771 = vpop.f32.mrf.mxu0
        %v1772 = vadd.f32 %v1611, %v1771
        %v1773 = vpop.f32.mrf.mxu0
        %1774 = vmatprep.mubr.bf16.mxu0 %v1240
        %1775 = vmatmul.mubr.bf16.gmra.mxu0 %v1239
        %v1776 = vpop.f32.mrf.mxu0
        %v1777 = vadd.f32 %v1616, %v1776
        %v1778 = vpop.f32.mrf.mxu0
        %v1779 = vpop.f32.mrf.mxu0
        %v1780 = vadd.f32 %v1619, %v1779
        %v1781 = vpop.f32.mrf.mxu0
        %1782 = vmatprep.mubr.bf16.mxu0 %v1244
        %1783 = vmatmul.mubr.bf16.gmra.mxu0 %v1243
        %v1784 = vpop.f32.mrf.mxu0
        %v1785 = vadd.f32 %v1624, %v1784
        %v1786 = vpop.f32.mrf.mxu0
        %v1787 = vpop.f32.mrf.mxu0
        %v1788 = vadd.f32 %v1627, %v1787
        %v1789 = vpop.f32.mrf.mxu0
        %1790 = vmatprep.mubr.bf16.mxu0 %v1248
        %1791 = vmatmul.mubr.bf16.gmra.mxu0 %v1247
        %v1792 = vpop.f32.mrf.mxu0
        %v1793 = vadd.f32 %v1632, %v1792
        %v1794 = vpop.f32.mrf.mxu0
        %v1795 = vpop.f32.mrf.mxu0
        %v1796 = vadd.f32 %v1635, %v1795
        %v1797 = vpop.f32.mrf.mxu0
        %1798 = vmatprep.mubr.bf16.mxu0 %v1252
        %1799 = vmatmul.mubr.bf16.gmra.mxu0 %v1251
        %v1800 = vpop.f32.mrf.mxu0
        %v1801 = vadd.f32 %v1640, %v1800
        %v1802 = vpop.f32.mrf.mxu0
        %v1803 = vpop.f32.mrf.mxu0
        %v1804 = vadd.f32 %v1643, %v1803
        %v1805 = vpop.f32.mrf.mxu0
        %1806 = vmatprep.mubr.bf16.mxu0 %v1256
        %1807 = vmatmul.mubr.bf16.gmra.mxu0 %v1255
        %v1808 = vpop.f32.mrf.mxu0
        %v1809 = vadd.f32 %v1648, %v1808
        %v1810 = vpop.f32.mrf.mxu0
        %v1811 = vpop.f32.mrf.mxu0
        %v1812 = vadd.f32 %v1651, %v1811
        %v1813 = vpop.f32.mrf.mxu0
        %1814 = vmatprep.mubr.bf16.mxu0 %v1260
        %1815 = vmatmul.mubr.bf16.gmra.mxu0 %v1259
        %v1816 = vpop.f32.mrf.mxu0
        %v1817 = vadd.f32 %v1656, %v1816
        %v1818 = vpop.f32.mrf.mxu0
        %v1819 = vpop.f32.mrf.mxu0
        %v1820 = vadd.f32 %v1659, %v1819
        %v1821 = vpop.f32.mrf.mxu0
        %1822 = vmatprep.mubr.bf16.mxu0 %v1264
        %1823 = vmatmul.mubr.bf16.gmra.mxu0 %v1263
        %v1824 = vpop.f32.mrf.mxu0
        %v1825 = vadd.f32 %v1664, %v1824
        %v1826 = vpop.f32.mrf.mxu0
        %v1827 = vpop.f32.mrf.mxu0
        %v1828 = vadd.f32 %v1667, %v1827
        %v1829 = vpop.f32.mrf.mxu0
        %1830 = vmatprep.mubr.bf16.mxu0 %v1268
        %1831 = vmatmul.mubr.bf16.gmra.mxu0 %v1267
        %v1832 = vpop.f32.mrf.mxu0
        %v1833 = vadd.f32 %v1672, %v1832
        %v1834 = vpop.f32.mrf.mxu0
        %v1835 = vpop.f32.mrf.mxu0
        %v1836 = vadd.f32 %v1675, %v1835
        %v1837 = vpop.f32.mrf.mxu0
        %1838 = vmatprep.mubr.bf16.mxu0 %v1272
        %1839 = vmatmul.mubr.bf16.gmra.mxu0 %v1271
        %v1840 = vpop.f32.mrf.mxu0
        %v1841 = vadd.f32 %v1680, %v1840
        %v1842 = vpop.f32.mrf.mxu0
        %v1843 = vpop.f32.mrf.mxu0
        %v1844 = vadd.f32 %v1683, %v1843
        %v1845 = vpop.f32.mrf.mxu0
        %1846 = vmatprep.mubr.bf16.mxu0 %v1276
        %1847 = vmatmul.mubr.bf16.gmra.mxu0 %v1275
        %v1848 = vpop.f32.mrf.mxu0
        %v1849 = vadd.f32 %v1688, %v1848
        %v1850 = vpop.f32.mrf.mxu0
        %v1851 = vpop.f32.mrf.mxu0
        %v1852 = vadd.f32 %v1691, %v1851
        %v1853 = vpop.f32.mrf.mxu0
        %1854 = vdwg.mxu0
        %v1855 = vadd.f32 %v861, %v1729
        %v1856 = vadd.f32 %v862, %v1732
        %v1857 = vadd.f32 %v863, %v1737
        %v1858 = vadd.f32 %v864, %v1740
        %v1859 = vadd.f32 %v865, %v1745
        %v1860 = vadd.f32 %v866, %v1748
        %v1861 = vadd.f32 %v867, %v1753
        %v1862 = vadd.f32 %v868, %v1756
        %v1863 = vadd.f32 %v869, %v1761
        %v1864 = vadd.f32 %v870, %v1764
        %v1865 = vadd.f32 %v871, %v1769
        %v1866 = vadd.f32 %v872, %v1772
        %v1867 = vadd.f32 %v873, %v1777
        %v1868 = vadd.f32 %v874, %v1780
        %v1869 = vadd.f32 %v875, %v1785
        %v1870 = vadd.f32 %v876, %v1788
        %v1871 = vadd.f32 %v877, %v1793
        %v1872 = vadd.f32 %v878, %v1796
        %v1873 = vadd.f32 %v879, %v1801
        %v1874 = vadd.f32 %v880, %v1804
        %v1875 = vadd.f32 %v881, %v1809
        %v1876 = vadd.f32 %v882, %v1812
        %v1877 = vadd.f32 %v883, %v1817
        %v1878 = vadd.f32 %v884, %v1820
        %v1879 = vadd.f32 %v885, %v1825
        %v1880 = vadd.f32 %v886, %v1828
        %v1881 = vadd.f32 %v887, %v1833
        %v1882 = vadd.f32 %v888, %v1836
        %v1883 = vadd.f32 %v889, %v1841
        %v1884 = vadd.f32 %v890, %v1844
        %v1885 = vadd.f32 %v891, %v1849
        %v1886 = vadd.f32 %v892, %v1852
        %1887 = vst [vmem:[#allocation2] sm:$0xff] %v1855
        %1888 = vst [vmem:[#allocation2 + $0x8] sm:$0xff] %v1856
        %1889 = vst [vmem:[#allocation2 + $0x10] sm:$0xff] %v1857
        %1890 = vst [vmem:[#allocation2 + $0x18] sm:$0xff] %v1858
        %1891 = vst [vmem:[#allocation2 + $0x20] sm:$0xff] %v1859
        %1892 = vst [vmem:[#allocation2 + $0x28] sm:$0xff] %v1860
        %1893 = vst [vmem:[#allocation2 + $0x30] sm:$0xff] %v1861
        %1894 = vst [vmem:[#allocation2 + $0x38] sm:$0xff] %v1862
        %1895 = vst [vmem:[#allocation2 + $0x40] sm:$0xff] %v1863
        %1896 = vst [vmem:[#allocation2 + $0x48] sm:$0xff] %v1864
        %1897 = vst [vmem:[#allocation2 + $0x50] sm:$0xff] %v1865
        %1898 = vst [vmem:[#allocation2 + $0x58] sm:$0xff] %v1866
        %1899 = vst [vmem:[#allocation2 + $0x60] sm:$0xff] %v1867
        %1900 = vst [vmem:[#allocation2 + $0x68] sm:$0xff] %v1868
        %1901 = vst [vmem:[#allocation2 + $0x70] sm:$0xff] %v1869
        %1902 = vst [vmem:[#allocation2 + $0x78] sm:$0xff] %v1870
        %1903 = vst [vmem:[#allocation2 + $0x80] sm:$0xff] %v1871
        %1904 = vst [vmem:[#allocation2 + $0x88] sm:$0xff] %v1872
        %1905 = vst [vmem:[#allocation2 + $0x90] sm:$0xff] %v1873
        %1906 = vst [vmem:[#allocation2 + $0x98] sm:$0xff] %v1874
        %1907 = vst [vmem:[#allocation2 + $0xa0] sm:$0xff] %v1875
        %1908 = vst [vmem:[#allocation2 + $0xa8] sm:$0xff] %v1876
        %1909 = vst [vmem:[#allocation2 + $0xb0] sm:$0xff] %v1877
        %1910 = vst [vmem:[#allocation2 + $0xb8] sm:$0xff] %v1878
        %1911 = vst [vmem:[#allocation2 + $0xc0] sm:$0xff] %v1879
        %1912 = vst [vmem:[#allocation2 + $0xc8] sm:$0xff] %v1880
        %1913 = vst [vmem:[#allocation2 + $0xd0] sm:$0xff] %v1881
        %1914 = vst [vmem:[#allocation2 + $0xd8] sm:$0xff] %v1882
        %1915 = vst [vmem:[#allocation2 + $0xe0] sm:$0xff] %v1883
        %1916 = vst [vmem:[#allocation2 + $0xe8] sm:$0xff] %v1884
        %1917 = vst [vmem:[#allocation2 + $0xf0] sm:$0xff] %v1885
        %1918 = vst [vmem:[#allocation2 + $0xf8] sm:$0xff] %v1886
        // Predicated region
        $region77: #{tpu_custom_call.1} parent=43 // pred_check
          %p1919 = pneg %p429
        $region78: #{tpu_custom_call.1} parent=43 // pred_check_branch
          %1921 = sbr.rel (%p1919) target = $region80
        $region79: #{tpu_custom_call.1} parent=43 // pred_region
          %v1922 = vld [vmem:[#allocation3] sm:$0xff]
          %v1923 = vld [vmem:[#allocation3 + $0x8] sm:$0xff]
          %v1924 = vld [vmem:[#allocation3 + $0x10] sm:$0xff]
          %v1925 = vld [vmem:[#allocation3 + $0x18] sm:$0xff]
          %v1926 = vld [vmem:[#allocation3 + $0x20] sm:$0xff]
          %v1927 = vld [vmem:[#allocation3 + $0x28] sm:$0xff]
          %v1928 = vld [vmem:[#allocation3 + $0x30] sm:$0xff]
          %v1929 = vld [vmem:[#allocation3 + $0x38] sm:$0xff]
          %v1930 = vld [vmem:[#allocation3 + $0x40] sm:$0xff]
          %v1931 = vld [vmem:[#allocation3 + $0x48] sm:$0xff]
          %v1932 = vld [vmem:[#allocation3 + $0x50] sm:$0xff]
          %v1933 = vld [vmem:[#allocation3 + $0x58] sm:$0xff]
          %v1934 = vld [vmem:[#allocation3 + $0x60] sm:$0xff]
          %v1935 = vld [vmem:[#allocation3 + $0x68] sm:$0xff]
          %v1936 = vld [vmem:[#allocation3 + $0x70] sm:$0xff]
          %v1937 = vld [vmem:[#allocation3 + $0x78] sm:$0xff]
          %v1938 = vld [vmem:[#allocation3 + $0x80] sm:$0xff]
          %v1939 = vld [vmem:[#allocation3 + $0x88] sm:$0xff]
          %v1940 = vld [vmem:[#allocation3 + $0x90] sm:$0xff]
          %v1941 = vld [vmem:[#allocation3 + $0x98] sm:$0xff]
          %v1942 = vld [vmem:[#allocation3 + $0xa0] sm:$0xff]
          %v1943 = vld [vmem:[#allocation3 + $0xa8] sm:$0xff]
          %v1944 = vld [vmem:[#allocation3 + $0xb0] sm:$0xff]
          %v1945 = vld [vmem:[#allocation3 + $0xb8] sm:$0xff]
          %v1946 = vld [vmem:[#allocation3 + $0xc0] sm:$0xff]
          %v1947 = vld [vmem:[#allocation3 + $0xc8] sm:$0xff]
          %v1948 = vld [vmem:[#allocation3 + $0xd0] sm:$0xff]
          %v1949 = vld [vmem:[#allocation3 + $0xd8] sm:$0xff]
          %v1950 = vld [vmem:[#allocation3 + $0xe0] sm:$0xff]
          %v1951 = vld [vmem:[#allocation3 + $0xe8] sm:$0xff]
          %v1952 = vld [vmem:[#allocation3 + $0xf0] sm:$0xff]
          %v1953 = vld [vmem:[#allocation3 + $0xf8] sm:$0xff]
          %v1954 = vld [vmem:[#allocation2] sm:$0xff]
          %v1955 = vld [vmem:[#allocation2 + $0x8] sm:$0xff]
          %v1956 = vld [vmem:[#allocation2 + $0x10] sm:$0xff]
          %v1957 = vld [vmem:[#allocation2 + $0x18] sm:$0xff]
          %v1958 = vld [vmem:[#allocation2 + $0x20] sm:$0xff]
          %v1959 = vld [vmem:[#allocation2 + $0x28] sm:$0xff]
          %v1960 = vld [vmem:[#allocation2 + $0x30] sm:$0xff]
          %v1961 = vld [vmem:[#allocation2 + $0x38] sm:$0xff]
          %v1962 = vld [vmem:[#allocation2 + $0x40] sm:$0xff]
          %v1963 = vld [vmem:[#allocation2 + $0x48] sm:$0xff]
          %v1964 = vld [vmem:[#allocation2 + $0x50] sm:$0xff]
          %v1965 = vld [vmem:[#allocation2 + $0x58] sm:$0xff]
          %v1966 = vld [vmem:[#allocation2 + $0x60] sm:$0xff]
          %v1967 = vld [vmem:[#allocation2 + $0x68] sm:$0xff]
          %v1968 = vld [vmem:[#allocation2 + $0x70] sm:$0xff]
          %v1969 = vld [vmem:[#allocation2 + $0x78] sm:$0xff]
          %v1970 = vld [vmem:[#allocation2 + $0x80] sm:$0xff]
          %v1971 = vld [vmem:[#allocation2 + $0x88] sm:$0xff]
          %v1972 = vld [vmem:[#allocation2 + $0x90] sm:$0xff]
          %v1973 = vld [vmem:[#allocation2 + $0x98] sm:$0xff]
          %v1974 = vld [vmem:[#allocation2 + $0xa0] sm:$0xff]
          %v1975 = vld [vmem:[#allocation2 + $0xa8] sm:$0xff]
          %v1976 = vld [vmem:[#allocation2 + $0xb0] sm:$0xff]
          %v1977 = vld [vmem:[#allocation2 + $0xb8] sm:$0xff]
          %v1978 = vld [vmem:[#allocation2 + $0xc0] sm:$0xff]
          %v1979 = vld [vmem:[#allocation2 + $0xc8] sm:$0xff]
          %v1980 = vld [vmem:[#allocation2 + $0xd0] sm:$0xff]
          %v1981 = vld [vmem:[#allocation2 + $0xd8] sm:$0xff]
          %v1982 = vld [vmem:[#allocation2 + $0xe0] sm:$0xff]
          %v1983 = vld [vmem:[#allocation2 + $0xe8] sm:$0xff]
          %v1984 = vld [vmem:[#allocation2 + $0xf0] sm:$0xff]
          %v1985 = vld [vmem:[#allocation2 + $0xf8] sm:$0xff]
          %v1986 = vpack.c.bf16 %v1955, %v1954
          %v1987 = vpack.c.bf16 %v1957, %v1956
          %v1988 = vpack.c.bf16 %v1959, %v1958
          %v1989 = vpack.c.bf16 %v1961, %v1960
          %v1990 = vpack.c.bf16 %v1963, %v1962
          %v1991 = vpack.c.bf16 %v1965, %v1964
          %v1992 = vpack.c.bf16 %v1967, %v1966
          %v1993 = vpack.c.bf16 %v1969, %v1968
          %v1994 = vpack.c.bf16 %v1971, %v1970
          %v1995 = vpack.c.bf16 %v1973, %v1972
          %v1996 = vpack.c.bf16 %v1975, %v1974
          %v1997 = vpack.c.bf16 %v1977, %v1976
          %v1998 = vpack.c.bf16 %v1979, %v1978
          %v1999 = vpack.c.bf16 %v1981, %v1980
          %v2000 = vpack.c.bf16 %v1983, %v1982
          %v2001 = vpack.c.bf16 %v1985, %v1984
          %v2002 = vld [vmem:[%s383] sm:$0xf]
          %v2003 = vld [vmem:[%s383 + $0x4] sm:$0xf]
          %v2004 = vld [vmem:[%s383 + $0x8] sm:$0xf]
          %v2005 = vld [vmem:[%s383 + $0xc] sm:$0xf]
          %v2006 = vld [vmem:[%s383 + $0x10] sm:$0xf]
          %v2007 = vld [vmem:[%s383 + $0x14] sm:$0xf]
          %v2008 = vld [vmem:[%s383 + $0x18] sm:$0xf]
          %v2009 = vld [vmem:[%s383 + $0x1c] sm:$0xf]
          %v2010 = vld [vmem:[%s383 + $0x20] sm:$0xf]
          %v2011 = vld [vmem:[%s383 + $0x24] sm:$0xf]
          %v2012 = vld [vmem:[%s383 + $0x28] sm:$0xf]
          %v2013 = vld [vmem:[%s383 + $0x2c] sm:$0xf]
          %v2014 = vld [vmem:[%s383 + $0x30] sm:$0xf]
          %v2015 = vld [vmem:[%s383 + $0x34] sm:$0xf]
          %v2016 = vld [vmem:[%s383 + $0x38] sm:$0xf]
          %v2017 = vld [vmem:[%s383 + $0x3c] sm:$0xf]
          %v2034 = vunpack.c.l.b16 %v2002
          %v2035 = vunpack.c.l.b16 %v2003
          %v2036 = vunpack.c.l.b16 %v2004
          %v2037 = vunpack.c.l.b16 %v2005
          %v2038 = vunpack.c.l.b16 %v2006
          %v2039 = vunpack.c.l.b16 %v2007
          %v2040 = vunpack.c.l.b16 %v2008
          %v2041 = vunpack.c.l.b16 %v2009
          %v2042 = vunpack.c.l.b16 %v2010
          %v2043 = vunpack.c.l.b16 %v2011
          %v2044 = vunpack.c.l.b16 %v2012
          %v2045 = vunpack.c.l.b16 %v2013
          %v2046 = vunpack.c.l.b16 %v2014
          %v2047 = vunpack.c.l.b16 %v2015
          %v2048 = vunpack.c.l.b16 %v2016
          %v2049 = vunpack.c.l.b16 %v2017
          %v2050 = vpack.c.b16 %v2035, %v2034
          %v2051 = vpack.c.b16 %v2037, %v2036
          %v2052 = vpack.c.b16 %v2039, %v2038
          %v2053 = vpack.c.b16 %v2041, %v2040
          %v2054 = vpack.c.b16 %v2043, %v2042
          %v2055 = vpack.c.b16 %v2045, %v2044
          %v2056 = vpack.c.b16 %v2047, %v2046
          %v2057 = vpack.c.b16 %v2049, %v2048
          %2066 = vmatprep.subr.bf16.mxu0 0
          %2067 = vmatpush1.bf16.msra.mxu0 %v2057
          %2068 = vmatprep.subr.bf16.mxu0 0
          %2069 = vmatpush1.bf16.msra.mxu0 %v2056
          %2070 = vmatprep.subr.bf16.mxu0 0
          %2071 = vmatpush1.bf16.msra.mxu0 %v2055
          %2072 = vmatprep.subr.bf16.mxu0 0
          %2073 = vmatpush1.bf16.msra.mxu0 %v2054
          %2074 = vmatprep.subr.bf16.mxu0 0
          %2075 = vmatpush1.bf16.msra.mxu0 %v2053
          %2076 = vmatprep.subr.bf16.mxu0 0
          %2077 = vmatpush1.bf16.msra.mxu0 %v2052
          %2078 = vmatprep.subr.bf16.mxu0 0
          %2079 = vmatpush1.bf16.msra.mxu0 %v2051
          %2080 = vmatprep.subr.bf16.mxu0 0
          %2081 = vmatpush1.bf16.msra.mxu0 %v2050
          %2082 = vmatprep.subr.bf16.mxu0 0
          %2083 = vmatpush2.bf16.msra.mxu0 0
          %2084 = vmatprep.subr.bf16.mxu0 0
          %2085 = vmatpush2.bf16.msra.mxu0 0
          %2086 = vmatprep.subr.bf16.mxu0 0
          %2087 = vmatpush2.bf16.msra.mxu0 0
          %2088 = vmatprep.subr.bf16.mxu0 0
          %2089 = vmatpush2.bf16.msra.mxu0 0
          %2090 = vmatprep.subr.bf16.mxu0 0
          %2091 = vmatpush2.bf16.msra.mxu0 0
          %2092 = vmatprep.subr.bf16.mxu0 0
          %2093 = vmatpush2.bf16.msra.mxu0 0
          %2094 = vmatprep.subr.bf16.mxu0 0
          %2095 = vmatpush2.bf16.msra.mxu0 0
          %2096 = vmatprep.subr.bf16.mxu0 0
          %2097 = vmatpush2.bf16.msra.mxu0 0
          %2098 = vmatprep.mubr.bf16.mxu0 0
          %2099 = vmatmul.mubr.bf16.gmra.mxu0 %v1986
          %v2100 = vpop.f32.mrf.mxu0
          %v2101 = vadd.f32 0.0, %v2100
          %v2102 = vpop.f32.mrf.mxu0
          %v2103 = vpop.f32.mrf.mxu0
          %v2104 = vadd.f32 0.0, %v2103
          %v2105 = vpop.f32.mrf.mxu0
          %2106 = vmatprep.mubr.bf16.mxu0 0
          %2107 = vmatmul.mubr.bf16.gmra.mxu0 %v1987
          %v2108 = vpop.f32.mrf.mxu0
          %v2109 = vadd.f32 0.0, %v2108
          %v2110 = vpop.f32.mrf.mxu0
          %v2111 = vpop.f32.mrf.mxu0
          %v2112 = vadd.f32 0.0, %v2111
          %v2113 = vpop.f32.mrf.mxu0
          %2114 = vmatprep.mubr.bf16.mxu0 0
          %2115 = vmatmul.mubr.bf16.gmra.mxu0 %v1988
          %v2116 = vpop.f32.mrf.mxu0
          %v2117 = vadd.f32 0.0, %v2116
          %v2118 = vpop.f32.mrf.mxu0
          %v2119 = vpop.f32.mrf.mxu0
          %v2120 = vadd.f32 0.0, %v2119
          %v2121 = vpop.f32.mrf.mxu0
          %2122 = vmatprep.mubr.bf16.mxu0 0
          %2123 = vmatmul.mubr.bf16.gmra.mxu0 %v1989
          %v2124 = vpop.f32.mrf.mxu0
          %v2125 = vadd.f32 0.0, %v2124
          %v2126 = vpop.f32.mrf.mxu0
          %v2127 = vpop.f32.mrf.mxu0
          %v2128 = vadd.f32 0.0, %v2127
          %v2129 = vpop.f32.mrf.mxu0
          %2130 = vmatprep.mubr.bf16.mxu0 0
          %2131 = vmatmul.mubr.bf16.gmra.mxu0 %v1990
          %v2132 = vpop.f32.mrf.mxu0
          %v2133 = vadd.f32 0.0, %v2132
          %v2134 = vpop.f32.mrf.mxu0
          %v2135 = vpop.f32.mrf.mxu0
          %v2136 = vadd.f32 0.0, %v2135
          %v2137 = vpop.f32.mrf.mxu0
          %2138 = vmatprep.mubr.bf16.mxu0 0
          %2139 = vmatmul.mubr.bf16.gmra.mxu0 %v1991
          %v2140 = vpop.f32.mrf.mxu0
          %v2141 = vadd.f32 0.0, %v2140
          %v2142 = vpop.f32.mrf.mxu0
          %v2143 = vpop.f32.mrf.mxu0
          %v2144 = vadd.f32 0.0, %v2143
          %v2145 = vpop.f32.mrf.mxu0
          %2146 = vmatprep.mubr.bf16.mxu0 0
          %2147 = vmatmul.mubr.bf16.gmra.mxu0 %v1992
          %v2148 = vpop.f32.mrf.mxu0
          %v2149 = vadd.f32 0.0, %v2148
          %v2150 = vpop.f32.mrf.mxu0
          %v2151 = vpop.f32.mrf.mxu0
          %v2152 = vadd.f32 0.0, %v2151
          %v2153 = vpop.f32.mrf.mxu0
          %2154 = vmatprep.mubr.bf16.mxu0 0
          %2155 = vmatmul.mubr.bf16.gmra.mxu0 %v1993
          %v2156 = vpop.f32.mrf.mxu0
          %v2157 = vadd.f32 0.0, %v2156
          %v2158 = vpop.f32.mrf.mxu0
          %v2159 = vpop.f32.mrf.mxu0
          %v2160 = vadd.f32 0.0, %v2159
          %v2161 = vpop.f32.mrf.mxu0
          %2162 = vmatprep.mubr.bf16.mxu0 0
          %2163 = vmatmul.mubr.bf16.gmra.mxu0 %v1994
          %v2164 = vpop.f32.mrf.mxu0
          %v2165 = vadd.f32 0.0, %v2164
          %v2166 = vpop.f32.mrf.mxu0
          %v2167 = vpop.f32.mrf.mxu0
          %v2168 = vadd.f32 0.0, %v2167
          %v2169 = vpop.f32.mrf.mxu0
          %2170 = vmatprep.mubr.bf16.mxu0 0
          %2171 = vmatmul.mubr.bf16.gmra.mxu0 %v1995
          %v2172 = vpop.f32.mrf.mxu0
          %v2173 = vadd.f32 0.0, %v2172
          %v2174 = vpop.f32.mrf.mxu0
          %v2175 = vpop.f32.mrf.mxu0
          %v2176 = vadd.f32 0.0, %v2175
          %v2177 = vpop.f32.mrf.mxu0
          %2178 = vmatprep.mubr.bf16.mxu0 0
          %2179 = vmatmul.mubr.bf16.gmra.mxu0 %v1996
          %v2180 = vpop.f32.mrf.mxu0
          %v2181 = vadd.f32 0.0, %v2180
          %v2182 = vpop.f32.mrf.mxu0
          %v2183 = vpop.f32.mrf.mxu0
          %v2184 = vadd.f32 0.0, %v2183
          %v2185 = vpop.f32.mrf.mxu0
          %2186 = vmatprep.mubr.bf16.mxu0 0
          %2187 = vmatmul.mubr.bf16.gmra.mxu0 %v1997
          %v2188 = vpop.f32.mrf.mxu0
          %v2189 = vadd.f32 0.0, %v2188
          %v2190 = vpop.f32.mrf.mxu0
          %v2191 = vpop.f32.mrf.mxu0
          %v2192 = vadd.f32 0.0, %v2191
          %v2193 = vpop.f32.mrf.mxu0
          %2194 = vmatprep.mubr.bf16.mxu0 0
          %2195 = vmatmul.mubr.bf16.gmra.mxu0 %v1998
          %v2196 = vpop.f32.mrf.mxu0
          %v2197 = vadd.f32 0.0, %v2196
          %v2198 = vpop.f32.mrf.mxu0
          %v2199 = vpop.f32.mrf.mxu0
          %v2200 = vadd.f32 0.0, %v2199
          %v2201 = vpop.f32.mrf.mxu0
          %2202 = vmatprep.mubr.bf16.mxu0 0
          %2203 = vmatmul.mubr.bf16.gmra.mxu0 %v1999
          %v2204 = vpop.f32.mrf.mxu0
          %v2205 = vadd.f32 0.0, %v2204
          %v2206 = vpop.f32.mrf.mxu0
          %v2207 = vpop.f32.mrf.mxu0
          %v2208 = vadd.f32 0.0, %v2207
          %v2209 = vpop.f32.mrf.mxu0
          %2210 = vmatprep.mubr.bf16.mxu0 0
          %2211 = vmatmul.mubr.bf16.gmra.mxu0 %v2000
          %v2212 = vpop.f32.mrf.mxu0
          %v2213 = vadd.f32 0.0, %v2212
          %v2214 = vpop.f32.mrf.mxu0
          %v2215 = vpop.f32.mrf.mxu0
          %v2216 = vadd.f32 0.0, %v2215
          %v2217 = vpop.f32.mrf.mxu0
          %2218 = vmatprep.mubr.bf16.mxu0 0
          %2219 = vmatmul.mubr.bf16.gmra.mxu0 %v2001
          %v2220 = vpop.f32.mrf.mxu0
          %v2221 = vadd.f32 0.0, %v2220
          %v2222 = vpop.f32.mrf.mxu0
          %v2223 = vpop.f32.mrf.mxu0
          %v2224 = vadd.f32 0.0, %v2223
          %v2225 = vpop.f32.mrf.mxu0
          %2226 = vdwg.mxu0
          %v2227 = vadd.f32 %v1922, %v2101
          %v2228 = vadd.f32 %v1923, %v2104
          %v2229 = vadd.f32 %v1924, %v2109
          %v2230 = vadd.f32 %v1925, %v2112
          %v2231 = vadd.f32 %v1926, %v2117
          %v2232 = vadd.f32 %v1927, %v2120
          %v2233 = vadd.f32 %v1928, %v2125
          %v2234 = vadd.f32 %v1929, %v2128
          %v2235 = vadd.f32 %v1930, %v2133
          %v2236 = vadd.f32 %v1931, %v2136
          %v2237 = vadd.f32 %v1932, %v2141
          %v2238 = vadd.f32 %v1933, %v2144
          %v2239 = vadd.f32 %v1934, %v2149
          %v2240 = vadd.f32 %v1935, %v2152
          %v2241 = vadd.f32 %v1936, %v2157
          %v2242 = vadd.f32 %v1937, %v2160
          %v2243 = vadd.f32 %v1938, %v2165
          %v2244 = vadd.f32 %v1939, %v2168
          %v2245 = vadd.f32 %v1940, %v2173
          %v2246 = vadd.f32 %v1941, %v2176
          %v2247 = vadd.f32 %v1942, %v2181
          %v2248 = vadd.f32 %v1943, %v2184
          %v2249 = vadd.f32 %v1944, %v2189
          %v2250 = vadd.f32 %v1945, %v2192
          %v2251 = vadd.f32 %v1946, %v2197
          %v2252 = vadd.f32 %v1947, %v2200
          %v2253 = vadd.f32 %v1948, %v2205
          %v2254 = vadd.f32 %v1949, %v2208
          %v2255 = vadd.f32 %v1950, %v2213
          %v2256 = vadd.f32 %v1951, %v2216
          %v2257 = vadd.f32 %v1952, %v2221
          %v2258 = vadd.f32 %v1953, %v2224
          %2259 = vst [vmem:[#allocation3] sm:$0xff] %v2227
          %2260 = vst [vmem:[#allocation3 + $0x8] sm:$0xff] %v2228
          %2261 = vst [vmem:[#allocation3 + $0x10] sm:$0xff] %v2229
          %2262 = vst [vmem:[#allocation3 + $0x18] sm:$0xff] %v2230
          %2263 = vst [vmem:[#allocation3 + $0x20] sm:$0xff] %v2231
          %2264 = vst [vmem:[#allocation3 + $0x28] sm:$0xff] %v2232
          %2265 = vst [vmem:[#allocation3 + $0x30] sm:$0xff] %v2233
          %2266 = vst [vmem:[#allocation3 + $0x38] sm:$0xff] %v2234
          %2267 = vst [vmem:[#allocation3 + $0x40] sm:$0xff] %v2235
          %2268 = vst [vmem:[#allocation3 + $0x48] sm:$0xff] %v2236
          %2269 = vst [vmem:[#allocation3 + $0x50] sm:$0xff] %v2237
          %2270 = vst [vmem:[#allocation3 + $0x58] sm:$0xff] %v2238
          %2271 = vst [vmem:[#allocation3 + $0x60] sm:$0xff] %v2239
          %2272 = vst [vmem:[#allocation3 + $0x68] sm:$0xff] %v2240
          %2273 = vst [vmem:[#allocation3 + $0x70] sm:$0xff] %v2241
          %2274 = vst [vmem:[#allocation3 + $0x78] sm:$0xff] %v2242
          %2275 = vst [vmem:[#allocation3 + $0x80] sm:$0xff] %v2243
          %2276 = vst [vmem:[#allocation3 + $0x88] sm:$0xff] %v2244
          %2277 = vst [vmem:[#allocation3 + $0x90] sm:$0xff] %v2245
          %2278 = vst [vmem:[#allocation3 + $0x98] sm:$0xff] %v2246
          %2279 = vst [vmem:[#allocation3 + $0xa0] sm:$0xff] %v2247
          %2280 = vst [vmem:[#allocation3 + $0xa8] sm:$0xff] %v2248
          %2281 = vst [vmem:[#allocation3 + $0xb0] sm:$0xff] %v2249
          %2282 = vst [vmem:[#allocation3 + $0xb8] sm:$0xff] %v2250
          %2283 = vst [vmem:[#allocation3 + $0xc0] sm:$0xff] %v2251
          %2284 = vst [vmem:[#allocation3 + $0xc8] sm:$0xff] %v2252
          %2285 = vst [vmem:[#allocation3 + $0xd0] sm:$0xff] %v2253
          %2286 = vst [vmem:[#allocation3 + $0xd8] sm:$0xff] %v2254
          %2287 = vst [vmem:[#allocation3 + $0xe0] sm:$0xff] %v2255
          %2288 = vst [vmem:[#allocation3 + $0xe8] sm:$0xff] %v2256
          %2289 = vst [vmem:[#allocation3 + $0xf0] sm:$0xff] %v2257
          %2290 = vst [vmem:[#allocation3 + $0xf8] sm:$0xff] %v2258
        $region80: #{tpu_custom_call.1} parent=43 // pred_fallthru
          _
        %p2291 = scmp.eq.s32.totalorder %s31, 2
        %p2292 = pnand %p2291, %p429
        %p2293 = pneg %p2292
        // Predicated region
        $region81: #{tpu_custom_call.1} parent=43 // pred_check
          _
        $region82: #{tpu_custom_call.1} parent=43 // pred_check_branch
          %2295 = sbr.rel (%p2292) target = $region84
        $region83: #{tpu_custom_call.1} parent=43 // pred_region
          %v2296 = vld [vmem:[#allocation3] sm:$0xff]
          %v2297 = vld [vmem:[#allocation3 + $0x8] sm:$0xff]
          %v2298 = vld [vmem:[#allocation3 + $0x10] sm:$0xff]
          %v2299 = vld [vmem:[#allocation3 + $0x18] sm:$0xff]
          %v2300 = vld [vmem:[#allocation3 + $0x20] sm:$0xff]
          %v2301 = vld [vmem:[#allocation3 + $0x28] sm:$0xff]
          %v2302 = vld [vmem:[#allocation3 + $0x30] sm:$0xff]
          %v2303 = vld [vmem:[#allocation3 + $0x38] sm:$0xff]
          %v2304 = vld [vmem:[#allocation3 + $0x40] sm:$0xff]
          %v2305 = vld [vmem:[#allocation3 + $0x48] sm:$0xff]
          %v2306 = vld [vmem:[#allocation3 + $0x50] sm:$0xff]
          %v2307 = vld [vmem:[#allocation3 + $0x58] sm:$0xff]
          %v2308 = vld [vmem:[#allocation3 + $0x60] sm:$0xff]
          %v2309 = vld [vmem:[#allocation3 + $0x68] sm:$0xff]
          %v2310 = vld [vmem:[#allocation3 + $0x70] sm:$0xff]
          %v2311 = vld [vmem:[#allocation3 + $0x78] sm:$0xff]
          %v2312 = vld [vmem:[#allocation3 + $0x80] sm:$0xff]
          %v2313 = vld [vmem:[#allocation3 + $0x88] sm:$0xff]
          %v2314 = vld [vmem:[#allocation3 + $0x90] sm:$0xff]
          %v2315 = vld [vmem:[#allocation3 + $0x98] sm:$0xff]
          %v2316 = vld [vmem:[#allocation3 + $0xa0] sm:$0xff]
          %v2317 = vld [vmem:[#allocation3 + $0xa8] sm:$0xff]
          %v2318 = vld [vmem:[#allocation3 + $0xb0] sm:$0xff]
          %v2319 = vld [vmem:[#allocation3 + $0xb8] sm:$0xff]
          %v2320 = vld [vmem:[#allocation3 + $0xc0] sm:$0xff]
          %v2321 = vld [vmem:[#allocation3 + $0xc8] sm:$0xff]
          %v2322 = vld [vmem:[#allocation3 + $0xd0] sm:$0xff]
          %v2323 = vld [vmem:[#allocation3 + $0xd8] sm:$0xff]
          %v2324 = vld [vmem:[#allocation3 + $0xe0] sm:$0xff]
          %v2325 = vld [vmem:[#allocation3 + $0xe8] sm:$0xff]
          %v2326 = vld [vmem:[#allocation3 + $0xf0] sm:$0xff]
          %v2327 = vld [vmem:[#allocation3 + $0xf8] sm:$0xff]
          %v2328 = vmax.f32 %v2296, 0.0
          %v2329 = vmax.f32 %v2297, 0.0
          %v2330 = vmax.f32 %v2298, 0.0
          %v2331 = vmax.f32 %v2299, 0.0
          %v2332 = vmax.f32 %v2300, 0.0
          %v2333 = vmax.f32 %v2301, 0.0
          %v2334 = vmax.f32 %v2302, 0.0
          %v2335 = vmax.f32 %v2303, 0.0
          %v2336 = vmax.f32 %v2304, 0.0
          %v2337 = vmax.f32 %v2305, 0.0
          %v2338 = vmax.f32 %v2306, 0.0
          %v2339 = vmax.f32 %v2307, 0.0
          %v2340 = vmax.f32 %v2308, 0.0
          %v2341 = vmax.f32 %v2309, 0.0
          %v2342 = vmax.f32 %v2310, 0.0
          %v2343 = vmax.f32 %v2311, 0.0
          %v2344 = vmax.f32 %v2312, 0.0
          %v2345 = vmax.f32 %v2313, 0.0
          %v2346 = vmax.f32 %v2314, 0.0
          %v2347 = vmax.f32 %v2315, 0.0
          %v2348 = vmax.f32 %v2316, 0.0
          %v2349 = vmax.f32 %v2317, 0.0
          %v2350 = vmax.f32 %v2318, 0.0
          %v2351 = vmax.f32 %v2319, 0.0
          %v2352 = vmax.f32 %v2320, 0.0
          %v2353 = vmax.f32 %v2321, 0.0
          %v2354 = vmax.f32 %v2322, 0.0
          %v2355 = vmax.f32 %v2323, 0.0
          %v2356 = vmax.f32 %v2324, 0.0
          %v2357 = vmax.f32 %v2325, 0.0
          %v2358 = vmax.f32 %v2326, 0.0
          %v2359 = vmax.f32 %v2327, 0.0
          %v2360 = vpack.c.bf16 %v2329, %v2328
          %v2361 = vpack.c.bf16 %v2331, %v2330
          %v2362 = vpack.c.bf16 %v2333, %v2332
          %v2363 = vpack.c.bf16 %v2335, %v2334
          %v2364 = vpack.c.bf16 %v2337, %v2336
          %v2365 = vpack.c.bf16 %v2339, %v2338
          %v2366 = vpack.c.bf16 %v2341, %v2340
          %v2367 = vpack.c.bf16 %v2343, %v2342
          %v2368 = vpack.c.bf16 %v2345, %v2344
          %v2369 = vpack.c.bf16 %v2347, %v2346
          %v2370 = vpack.c.bf16 %v2349, %v2348
          %v2371 = vpack.c.bf16 %v2351, %v2350
          %v2372 = vpack.c.bf16 %v2353, %v2352
          %v2373 = vpack.c.bf16 %v2355, %v2354
          %v2374 = vpack.c.bf16 %v2357, %v2356
          %v2375 = vpack.c.bf16 %v2359, %v2358
          %v2392 = vunpack.c.l.b16 %v2360
          %v2393 = vunpack.c.h.b16 %v2360
          %v2394 = vunpack.c.l.b16 %v2361
          %v2395 = vunpack.c.h.b16 %v2361
          %v2396 = vunpack.c.l.b16 %v2362
          %v2397 = vunpack.c.h.b16 %v2362
          %v2398 = vunpack.c.l.b16 %v2363
          %v2399 = vunpack.c.h.b16 %v2363
          %v2400 = vunpack.c.l.b16 %v2364
          %v2401 = vunpack.c.h.b16 %v2364
          %v2402 = vunpack.c.l.b16 %v2365
          %v2403 = vunpack.c.h.b16 %v2365
          %v2404 = vunpack.c.l.b16 %v2366
          %v2405 = vunpack.c.h.b16 %v2366
          %v2406 = vunpack.c.l.b16 %v2367
          %v2407 = vunpack.c.h.b16 %v2367
          %v2408 = vunpack.c.l.b16 %v2368
          %v2409 = vunpack.c.h.b16 %v2368
          %v2410 = vunpack.c.l.b16 %v2369
          %v2411 = vunpack.c.h.b16 %v2369
          %v2412 = vunpack.c.l.b16 %v2370
          %v2413 = vunpack.c.h.b16 %v2370
          %v2414 = vunpack.c.l.b16 %v2371
          %v2415 = vunpack.c.h.b16 %v2371
          %v2416 = vunpack.c.l.b16 %v2372
          %v2417 = vunpack.c.h.b16 %v2372
          %v2418 = vunpack.c.l.b16 %v2373
          %v2419 = vunpack.c.h.b16 %v2373
          %v2420 = vunpack.c.l.b16 %v2374
          %v2421 = vunpack.c.h.b16 %v2374
          %v2422 = vunpack.c.l.b16 %v2375
          %v2423 = vunpack.c.h.b16 %v2375
          %v2424 = vpack.c.b16 %v2392, %v2392
          %v2425 = vpack.c.b16 %v2393, %v2393
          %v2426 = vpack.c.b16 %v2394, %v2394
          %v2427 = vpack.c.b16 %v2395, %v2395
          %v2428 = vpack.c.b16 %v2396, %v2396
          %v2429 = vpack.c.b16 %v2397, %v2397
          %v2430 = vpack.c.b16 %v2398, %v2398
          %v2431 = vpack.c.b16 %v2399, %v2399
          %v2432 = vpack.c.b16 %v2400, %v2400
          %v2433 = vpack.c.b16 %v2401, %v2401
          %v2434 = vpack.c.b16 %v2402, %v2402
          %v2435 = vpack.c.b16 %v2403, %v2403
          %v2436 = vpack.c.b16 %v2404, %v2404
          %v2437 = vpack.c.b16 %v2405, %v2405
          %v2438 = vpack.c.b16 %v2406, %v2406
          %v2439 = vpack.c.b16 %v2407, %v2407
          %v2440 = vpack.c.b16 %v2408, %v2408
          %v2441 = vpack.c.b16 %v2409, %v2409
          %v2442 = vpack.c.b16 %v2410, %v2410
          %v2443 = vpack.c.b16 %v2411, %v2411
          %v2444 = vpack.c.b16 %v2412, %v2412
          %v2445 = vpack.c.b16 %v2413, %v2413
          %v2446 = vpack.c.b16 %v2414, %v2414
          %v2447 = vpack.c.b16 %v2415, %v2415
          %v2448 = vpack.c.b16 %v2416, %v2416
          %v2449 = vpack.c.b16 %v2417, %v2417
          %v2450 = vpack.c.b16 %v2418, %v2418
          %v2451 = vpack.c.b16 %v2419, %v2419
          %v2452 = vpack.c.b16 %v2420, %v2420
          %v2453 = vpack.c.b16 %v2421, %v2421
          %v2454 = vpack.c.b16 %v2422, %v2422
          %v2455 = vpack.c.b16 %v2423, %v2423
          %2488 = vst [vmem:[%s421] sm:$0xf] %v2424
          %2489 = vst [vmem:[%s421 + $0x4] sm:$0xf] %v2425
          %2490 = vst [vmem:[%s421 + $0x8] sm:$0xf] %v2426
          %2491 = vst [vmem:[%s421 + $0xc] sm:$0xf] %v2427
          %2492 = vst [vmem:[%s421 + $0x10] sm:$0xf] %v2428
          %2493 = vst [vmem:[%s421 + $0x14] sm:$0xf] %v2429
          %2494 = vst [vmem:[%s421 + $0x18] sm:$0xf] %v2430
          %2495 = vst [vmem:[%s421 + $0x1c] sm:$0xf] %v2431
          %2496 = vst [vmem:[%s421 + $0x20] sm:$0xf] %v2432
          %2497 = vst [vmem:[%s421 + $0x24] sm:$0xf] %v2433
          %2498 = vst [vmem:[%s421 + $0x28] sm:$0xf] %v2434
          %2499 = vst [vmem:[%s421 + $0x2c] sm:$0xf] %v2435
          %2500 = vst [vmem:[%s421 + $0x30] sm:$0xf] %v2436
          %2501 = vst [vmem:[%s421 + $0x34] sm:$0xf] %v2437
          %2502 = vst [vmem:[%s421 + $0x38] sm:$0xf] %v2438
          %2503 = vst [vmem:[%s421 + $0x3c] sm:$0xf] %v2439
          %2504 = vst [vmem:[%s421 + $0x40] sm:$0xf] %v2440
          %2505 = vst [vmem:[%s421 + $0x44] sm:$0xf] %v2441
          %2506 = vst [vmem:[%s421 + $0x48] sm:$0xf] %v2442
          %2507 = vst [vmem:[%s421 + $0x4c] sm:$0xf] %v2443
          %2508 = vst [vmem:[%s421 + $0x50] sm:$0xf] %v2444
          %2509 = vst [vmem:[%s421 + $0x54] sm:$0xf] %v2445
          %2510 = vst [vmem:[%s421 + $0x58] sm:$0xf] %v2446
          %2511 = vst [vmem:[%s421 + $0x5c] sm:$0xf] %v2447
          %2512 = vst [vmem:[%s421 + $0x60] sm:$0xf] %v2448
          %2513 = vst [vmem:[%s421 + $0x64] sm:$0xf] %v2449
          %2514 = vst [vmem:[%s421 + $0x68] sm:$0xf] %v2450
          %2515 = vst [vmem:[%s421 + $0x6c] sm:$0xf] %v2451
          %2516 = vst [vmem:[%s421 + $0x70] sm:$0xf] %v2452
          %2517 = vst [vmem:[%s421 + $0x74] sm:$0xf] %v2453
          %2518 = vst [vmem:[%s421 + $0x78] sm:$0xf] %v2454
          %2519 = vst [vmem:[%s421 + $0x7c] sm:$0xf] %v2455
        $region84: #{tpu_custom_call.1} parent=43 // pred_fallthru
          _
        %s2520 = sand.u32 %s202, 1
        %s2521 = scalar_lea.sflag [#allocation6], %s2520
        %s2522 = sand.u32 %s202, 1
        %s2523 = smul.addr %s2522, 128
        %s2524 = scalar_lea.vmem [#allocation14], %s2523
        // Predicated region
        $region85: #{tpu_custom_call.1} parent=43 // pred_check
          %p2525 = pneg %p212
        $region86: #{tpu_custom_call.1} parent=43 // pred_check_branch
          %2527 = sbr.rel (%p2525) target = $region88
        $region87: #{tpu_custom_call.1} parent=43 // pred_region
          %s2528 = smul.u32 32, %s30
          %s2530 = ssub.s32 2048, 2048
          %2531 = vsyncadd %s2521, %s2530
          %s2532 = smul.addr %s2528, 64
          %s2533 = scalar_lea.hbm %s6, %s2532
          %s2534 = sshll.u32 %s2524, 4
          %s2535 = int_to_ptr.vmem [resolvable:$true] %s2534
          %2540 = dma.vmem_to_hbm [thread:$0]  %s2535, 2048, %s2533, %s2521, 64, 64, 4
        $region88: #{tpu_custom_call.1} parent=43 // pred_fallthru
          _
      $region44: #{tpu_custom_call.1} parent=5 // pred_fallthru
        _
      %p2541 = scmp.le.s32.totalorder 2, %s20
      // Predicated region
      $region89: #{tpu_custom_call.1} parent=5 // pred_check
        %p2542 = pneg %p2541
      $region90: #{tpu_custom_call.1} parent=5 // pred_check_branch
        %2544 = sbr.rel (%p2542) target = $region92
      $region91: #{tpu_custom_call.1} parent=5 // pred_region
        %s2545 = ssub.s32 %s20, 2
        // Predicated region
        $region93: #{tpu_custom_call.1} parent=91 // pred_check
          %p2546 = pneg %p218
        $region94: #{tpu_custom_call.1} parent=91 // pred_check_branch
          %2548 = sbr.rel (%p2546) target = $region96
        $region95: #{tpu_custom_call.1} parent=91 // pred_region
          %s2549 = sand.u32 %s203, 1
          %s2550 = scalar_lea.sflag [#allocation6], %s2549
          %s2551 = sand.u32 %s203, 1
          %s2552 = smul.addr %s2551, 128
          %s2553 = scalar_lea.vmem [#allocation14], %s2552
          %2554 = dma.done %s2550, 2048
        $region96: #{tpu_custom_call.1} parent=91 // pred_fallthru
          _
      $region92: #{tpu_custom_call.1} parent=5 // pred_fallthru
        _
    $region6: #{tpu_custom_call.1} parent=1 // loop_footer
      %s24 = sadd.s32 1, %s20
    $region7: #{tpu_custom_call.1} parent=1 // loop_footer_branch
      %19 = sbr.rel target = $region3
    $region8: #{tpu_custom_call.1} parent=1 // loop_exit
      _
    %2555 = vsyncpa [#allocation5], 1
    %s2556 = scalar_lea.sflag [#allocation5], 1
    %2557 = vsyncpa %s2556, 1
    %2558 = vsyncpa [#allocation8], 1
    %2559 = vsyncpa [#allocation12], 1
    %2560 = vsyncpa [#allocation6], 1
    %s2561 = scalar_lea.sflag [#allocation6], 1
    %2562 = vsyncpa %s2561, 1

</llo_original>
